<compile_context>
chip_gen: v7x
topology: tpu7x:2x2x1
jax: 0.10.0
libtpu: 0.0.40
codegen_flags: <defaults>
</compile_context>

<pallas_src>
import functools

import jax
import jax.numpy as jnp
from jax.experimental import pallas as pl
from jax.experimental.pallas import tpu as pltpu

_NUM_FEATS = 55     # 30 pred + 4 target box + 20 target cls + 1 mask
_LANES = 128

# feature-row offsets inside the packed array
_B1 = 0       # box 1: x, y, w, h, c
_B2 = 5       # box 2: x, y, w, h, c
_PCLS = 10    # 20 predicted class scores
_TBOX = 30    # target x, y, w, h
_TCLS = 34    # 20 target class scores
_MASK = 54    # has_object_map (0.0 / 1.0)


def _yolo_loss_kernel(x_ref, out_ref, acc_ref, *, S):
    """x_ref: (55, tpb, 128) packed block.  out_ref: (8, 128) per-chunk partial sums.
    acc_ref: VMEM (8, tpb, 128) elementwise accumulator (rows 0..3 used:
    reg, containing-obj, no-obj, cls)."""
    i = pl.program_id(1)

    @pl.when(i == 0)
    def _init():
        acc_ref[...] = jnp.zeros_like(acc_ref)

    mask = x_ref[_MASK]                 # (tpb, 128), 1.0 where the cell has an object
    obj = mask > 0.0                    # hoisted, reused by every guard below

    # ---------------- no-object confidence loss (both boxes) ----------------
    c1 = x_ref[_B1 + 4]
    c2 = x_ref[_B2 + 4]
    acc_ref[2] += (1.0 - mask) * (c1 * c1 + c2 * c2)

    # ---------------- class prediction loss ----------------
    cls_sse = jnp.zeros_like(mask)
    for c in range(20):
        d = x_ref[_PCLS + c] - x_ref[_TCLS + c]
        cls_sse += d * d
    acc_ref[3] += mask * cls_sse

    # ---------------- best-of-two box selection via IoU ----------------
    inv_s = 1.0 / float(S)
    txr = x_ref[_TBOX + 0]
    tyr = x_ref[_TBOX + 1]
    tw = x_ref[_TBOX + 2]
    th = x_ref[_TBOX + 3]
    tcx = txr * inv_s
    tcy = tyr * inv_s
    tx1 = tcx - 0.5 * tw
    ty1 = tcy - 0.5 * th
    tx2 = tcx + 0.5 * tw
    ty2 = tcy + 0.5 * th
    area_t = (tx2 - tx1) * (ty2 - ty1)

    def iou(px, py, pw, ph):
        cx = px * inv_s
        cy = py * inv_s
        px1 = cx - 0.5 * pw
        py1 = cy - 0.5 * ph
        px2 = cx + 0.5 * pw
        py2 = cy + 0.5 * ph
        wx = jnp.maximum(jnp.minimum(tx2, px2) - jnp.maximum(tx1, px1), 0.0)
        wy = jnp.maximum(jnp.minimum(ty2, py2) - jnp.maximum(ty1, py1), 0.0)
        inter = wx * wy
        area_p = (px2 - px1) * (py2 - py1)
        # Only object cells matter; guard the denominator for the (masked-out) rest.
        denom = jnp.where(obj, area_t + area_p - inter, 1.0)
        # EUP approximate reciprocal + one Newton step -> ~f32 accuracy, no VALU divide.
        r = pl.reciprocal(denom, approx=True)
        r = r * (2.0 - denom * r)
        return inter * r

    b1x, b1y, b1w, b1h = x_ref[_B1 + 0], x_ref[_B1 + 1], x_ref[_B1 + 2], x_ref[_B1 + 3]
    b2x, b2y, b2w, b2h = x_ref[_B2 + 0], x_ref[_B2 + 1], x_ref[_B2 + 2], x_ref[_B2 + 3]

    iou1 = iou(b1x, b1y, b1w, b1h)
    iou2 = iou(b2x, b2y, b2w, b2h)
    # Selection rule of find_best_iou_boxes: box 1 only if iou_1 > iou_2 (ties -> box 2).
    take1 = iou1 > iou2
    best_iou = jnp.where(take1, iou1, iou2)
    bx = jnp.where(take1, b1x, b2x)
    by = jnp.where(take1, b1y, b2y)
    bw = jnp.where(take1, b1w, b2w)
    bh = jnp.where(take1, b1h, b2h)
    bc = jnp.where(take1, c1, c2)

    # ---------------- regression loss (object cells only) ----------------
    dx = bx - txr
    dy = by - tyr
    # guard sqrt inputs for non-object / padding cells (masked out anyway)
    dw = jnp.sqrt(jnp.where(obj, bw, 1.0)) - jnp.sqrt(jnp.where(obj, tw, 1.0))
    dh = jnp.sqrt(jnp.where(obj, bh, 1.0)) - jnp.sqrt(jnp.where(obj, th, 1.0))
    acc_ref[0] += mask * (dx * dx + dy * dy + dw * dw + dh * dh)

    # ---------------- containing-object confidence loss ----------------
    dc = bc - best_iou
    acc_ref[1] += mask * (dc * dc)

    @pl.when(i == pl.num_programs(1) - 1)
    def _flush():
        # one sublane-reduce per chunk; the tiny cross-lane reduce happens in the wrapper
        out_ref[...] = jnp.sum(acc_ref[...], axis=1)


def yolo_loss(pred_tensor, target_boxes, target_cls, has_object_map,
              *, S, B, l_coord, l_noobj, block_cells=2048, num_chunks=2):
    """pred_tensor: (N,S,S,B*5+20), target_boxes: (N,S,S,4),
    target_cls: (N,S,S,20), has_object_map: (N,S,S) bool."""
    assert B == 2, "kernel implements the standard YOLO B=2 configuration"
    assert block_cells % (8 * _LANES) == 0

    N = pred_tensor.shape[0]
    P = N * S * S

    pred2d = pred_tensor.reshape(P, 5 * B + 20).astype(jnp.float32)
    tbox2d = target_boxes.reshape(P, 4).astype(jnp.float32)
    tcls2d = target_cls.reshape(P, 20).astype(jnp.float32)
    mask2d = has_object_map.reshape(P, 1).astype(jnp.float32)

    # single packed input: (P, 55) -> pad cells -> feature-major lane-dense planes
    packed = jnp.concatenate([pred2d, tbox2d, tcls2d, mask2d], axis=1)

    tpb = block_cells // _LANES                       # sublane rows per tile
    blocks = max(1, -(-P // block_cells))
    blocks = -(-blocks // num_chunks) * num_chunks    # round up to chunk multiple
    steps = blocks // num_chunks
    p_pad = blocks * block_cells

    packed = jnp.pad(packed, ((0, p_pad - P), (0, 0)))
    packed = packed.T.reshape(_NUM_FEATS, p_pad // _LANES, _LANES)

    kernel = functools.partial(_yolo_loss_kernel, S=S)

    out = pl.pallas_call(
        kernel,
        out_shape=jax.ShapeDtypeStruct((num_chunks * 8, _LANES), jnp.float32),
        grid_spec=pltpu.PrefetchScalarGridSpec(
            num_scalar_prefetch=0,
            grid=(num_chunks, steps),
            in_specs=[pl.BlockSpec((_NUM_FEATS, tpb, _LANES),
                                   lambda c, i: (0, c * steps + i, 0))],
            out_specs=pl.BlockSpec((8, _LANES), lambda c, i: (c, 0)),
            scratch_shapes=[pltpu.VMEM((8, tpb, _LANES), jnp.float32)],
        ),
        compiler_params=pltpu.CompilerParams(
            dimension_semantics=("parallel", "arbitrary")),
    )(packed)

    comp = jnp.sum(out.reshape(num_chunks, 8, _LANES), axis=(0, 2))   # (8,)
    reg_loss = comp[0]
    cont_loss = comp[1]
    no_obj_loss = comp[2]
    cls_loss = comp[3]
    total = l_coord * reg_loss + l_noobj * no_obj_loss + cont_loss + cls_loss
    # NOTE: raw sums (no /N), matching the provided PyTorch forward.
    return dict(total_loss=total,
                reg_loss=reg_loss,
                containing_obj_loss=cont_loss,
                no_obj_loss=no_obj_loss,
                cls_loss=cls_loss)


def _reference_jax(pred, tbox, tcls, obj, *, S, B, l_coord, l_noobj):
    """Plain-JAX reference (exact division) with the same dense-mask formulation."""
    N = pred.shape[0]
    P = N * S * S
    pred = pred.reshape(P, B * 5 + 20).astype(jnp.float32)
    tbox = tbox.reshape(P, 4).astype(jnp.float32)
    tcls = tcls.reshape(P, 20).astype(jnp.float32)
    m = obj.reshape(P, 1).astype(jnp.float32)

    cls_loss = jnp.sum(m * (pred[:, 5 * B:] - tcls) ** 2)
    no_obj = jnp.sum((1 - m) * (pred[:, 4:5] ** 2 + pred[:, 9:10] ** 2))

    def to_xyxy(b):
        x, y, w, h = b[:, 0:1] / S, b[:, 1:2] / S, b[:, 2:3], b[:, 3:4]
        return x - w / 2, y - h / 2, x + w / 2, y + h / 2

    tx1, ty1, tx2, ty2 = to_xyxy(tbox)
    at = (tx2 - tx1) * (ty2 - ty1)

    def iou(pb):
        px1, py1, px2, py2 = to_xyxy(pb)
        wx = jnp.maximum(jnp.minimum(tx2, px2) - jnp.maximum(tx1, px1), 0.0)
        wy = jnp.maximum(jnp.minimum(ty2, py2) - jnp.maximum(ty1, py1), 0.0)
        inter = wx * wy
        ap = (px2 - px1) * (py2 - py1)
        return inter / jnp.where(m > 0, at + ap - inter, 1.0)

    pb1, pb2 = pred[:, 0:5], pred[:, 5:10]
    i1, i2 = iou(pb1[:, :4]), iou(pb2[:, :4])
    take1 = i1 > i2
    best_iou = jnp.where(take1, i1, i2)
    best_box = jnp.where(take1, pb1, pb2)
    dxy = (best_box[:, 0:2] - tbox[:, 0:2]) ** 2
    dwh = (jnp.sqrt(jnp.where(m > 0, best_box[:, 2:4], 1.0))
           - jnp.sqrt(jnp.where(m > 0, tbox[:, 2:4], 1.0))) ** 2
    reg = jnp.sum(m * (dxy + dwh))
    cont = jnp.sum(m * (best_box[:, 4:5] - best_iou) ** 2)
    total = l_coord * reg + l_noobj * no_obj + cont + cls_loss
    return dict(total_loss=total, reg_loss=reg, containing_obj_loss=cont,
                no_obj_loss=no_obj, cls_loss=cls_loss)


if __name__ == "__main__":
    # Small, YOLO-consistent shapes: N=2 images, S=4 grid, B=2 boxes, 20 classes.
    N, S, B = 2, 4, 2
    l_coord, l_noobj = 5.0, 0.5

    key = jax.random.PRNGKey(0)
    k1, k2, k3, k4 = jax.random.split(key, 4)

    pred_tensor = jax.random.uniform(k1, (N, S, S, B * 5 + 20),
                                     dtype=jnp.float32, minval=0.05, maxval=0.95)
    target_boxes = jax.random.uniform(k2, (N, S, S, 4),
                                      dtype=jnp.float32, minval=0.1, maxval=0.9)
    target_cls = jax.random.uniform(k3, (N, S, S, 20), dtype=jnp.float32)
    has_object_map = jax.random.bernoulli(k4, p=0.5, shape=(N, S, S))
    has_object_map = has_object_map.at[0, 0, 0].set(True)   # ensure >=1 object cell

    losses = yolo_loss(pred_tensor, target_boxes, target_cls, has_object_map,
                       S=S, B=B, l_coord=l_coord, l_noobj=l_noobj)
    losses = jax.tree_util.tree_map(jax.block_until_ready, losses)

    ref = _reference_jax(pred_tensor, target_boxes, target_cls, has_object_map,
                         S=S, B=B, l_coord=l_coord, l_noobj=l_noobj)
    for k in losses:
        kv = float(losses[k])
        rv = float(jnp.ravel(ref[k])[0])
        assert abs(kv - rv) <= 1e-3 + 1e-3 * abs(rv), (k, kv, rv)

    print("KERNEL_OK")
</pallas_src>

<mosaic_0001>
module attributes {stable_mosaic.version = 11 : i64} {
  func.func @_yolo_loss_kernel(%arg0: i32, %arg1: i32, %arg2: memref<55x16x128xf32, #tpu.memory_space<vmem>>, %arg3: memref<8x128xf32, #tpu.memory_space<vmem>>, %arg4: memref<8x16x128xf32, #tpu.memory_space<vmem>>) attributes {dimension_semantics = [#tpu.dimension_semantics<parallel>, #tpu.dimension_semantics<arbitrary>], iteration_bounds = array<i64: 2, 1>, scalar_prefetch = 0 : i64, scratch_operands = 1 : i64, tpu.core_type = #tpu.core_type<tc>, window_params = [{transform_indices = @transform_0, window_bounds = array<i64: 55, 16, 128>}, {transform_indices = @transform_1, window_bounds = array<i64: 8, 128>}]} {
    %c0_i32 = arith.constant 0 : i32
    %0 = arith.cmpi eq, %arg1, %c0_i32 : i32
    %1 = arith.extui %0 : i1 to i32
    %c0_i32_0 = arith.constant 0 : i32
    %2 = arith.cmpi ne, %1, %c0_i32_0 : i32
    scf.if %2 {
      %cst_169 = arith.constant 0.000000e+00 : f32
      %343 = vector.broadcast %cst_169 : f32 to vector<8x16x128xf32>
      %c0_170 = arith.constant 0 : index
      %c0_171 = arith.constant 0 : index
      %c0_172 = arith.constant 0 : index
      %344 = vector.load %arg4[%c0_170, %c0_171, %c0_172] : memref<8x16x128xf32, #tpu.memory_space<vmem>>, vector<8x16x128xf32>
      tpu.vector_store %arg4[%c0_170, %c0_171, %c0_172], %343 {strides = array<i32>} : memref<8x16x128xf32, #tpu.memory_space<vmem>>, vector<8x16x128xf32>,
    } else {
    }
    %c54 = arith.constant 54 : index
    %c0 = arith.constant 0 : index
    %c0_1 = arith.constant 0 : index
    %3 = vector.load %arg2[%c54, %c0, %c0_1] : memref<55x16x128xf32, #tpu.memory_space<vmem>>, vector<1x16x128xf32>
    %4 = vector.shape_cast %3 : vector<1x16x128xf32> to vector<16x128xf32>
    %cst = arith.constant 0.000000e+00 : f32
    %5 = vector.broadcast %cst : f32 to vector<16x128xf32>
    %6 = arith.cmpf ogt, %4, %5 : vector<16x128xf32>
    %c4 = arith.constant 4 : index
    %c0_2 = arith.constant 0 : index
    %c0_3 = arith.constant 0 : index
    %7 = vector.load %arg2[%c4, %c0_2, %c0_3] : memref<55x16x128xf32, #tpu.memory_space<vmem>>, vector<1x16x128xf32>
    %8 = vector.shape_cast %7 : vector<1x16x128xf32> to vector<16x128xf32>
    %c9 = arith.constant 9 : index
    %c0_4 = arith.constant 0 : index
    %c0_5 = arith.constant 0 : index
    %9 = vector.load %arg2[%c9, %c0_4, %c0_5] : memref<55x16x128xf32, #tpu.memory_space<vmem>>, vector<1x16x128xf32>
    %10 = vector.shape_cast %9 : vector<1x16x128xf32> to vector<16x128xf32>
    %c2 = arith.constant 2 : index
    %c0_6 = arith.constant 0 : index
    %c0_7 = arith.constant 0 : index
    %11 = vector.load %arg4[%c2, %c0_6, %c0_7] : memref<8x16x128xf32, #tpu.memory_space<vmem>>, vector<1x16x128xf32>
    %12 = vector.shape_cast %11 : vector<1x16x128xf32> to vector<16x128xf32>
    %cst_8 = arith.constant 1.000000e+00 : f32
    %13 = vector.broadcast %cst_8 : f32 to vector<16x128xf32>
    %14 = arith.subf %13, %4 : vector<16x128xf32>
    %15 = arith.mulf %8, %8 : vector<16x128xf32>
    %16 = arith.mulf %10, %10 : vector<16x128xf32>
    %17 = arith.addf %15, %16 : vector<16x128xf32>
    %18 = arith.mulf %14, %17 : vector<16x128xf32>
    %19 = arith.addf %12, %18 : vector<16x128xf32>
    %c2_9 = arith.constant 2 : index
    %c0_10 = arith.constant 0 : index
    %c0_11 = arith.constant 0 : index
    %20 = vector.load %arg4[%c2_9, %c0_10, %c0_11] : memref<8x16x128xf32, #tpu.memory_space<vmem>>, vector<1x16x128xf32>
    %21 = vector.shape_cast %20 : vector<1x16x128xf32> to vector<16x128xf32>
    %22 = vector.shape_cast %19 : vector<16x128xf32> to vector<1x16x128xf32>
    tpu.vector_store %arg4[%c2_9, %c0_10, %c0_11], %22 {strides = array<i32>} : memref<8x16x128xf32, #tpu.memory_space<vmem>>, vector<1x16x128xf32>,
    %cst_12 = arith.constant 0.000000e+00 : f32
    %23 = vector.broadcast %cst_12 : f32 to vector<16x128xf32>
    %c10 = arith.constant 10 : index
    %c0_13 = arith.constant 0 : index
    %c0_14 = arith.constant 0 : index
    %24 = vector.load %arg2[%c10, %c0_13, %c0_14] : memref<55x16x128xf32, #tpu.memory_space<vmem>>, vector<1x16x128xf32>
    %25 = vector.shape_cast %24 : vector<1x16x128xf32> to vector<16x128xf32>
    %c34 = arith.constant 34 : index
    %c0_15 = arith.constant 0 : index
    %c0_16 = arith.constant 0 : index
    %26 = vector.load %arg2[%c34, %c0_15, %c0_16] : memref<55x16x128xf32, #tpu.memory_space<vmem>>, vector<1x16x128xf32>
    %27 = vector.shape_cast %26 : vector<1x16x128xf32> to vector<16x128xf32>
    %28 = arith.subf %25, %27 : vector<16x128xf32>
    %29 = arith.mulf %28, %28 : vector<16x128xf32>
    %30 = arith.addf %23, %29 : vector<16x128xf32>
    %c11 = arith.constant 11 : index
    %c0_17 = arith.constant 0 : index
    %c0_18 = arith.constant 0 : index
    %31 = vector.load %arg2[%c11, %c0_17, %c0_18] : memref<55x16x128xf32, #tpu.memory_space<vmem>>, vector<1x16x128xf32>
    %32 = vector.shape_cast %31 : vector<1x16x128xf32> to vector<16x128xf32>
    %c35 = arith.constant 35 : index
    %c0_19 = arith.constant 0 : index
    %c0_20 = arith.constant 0 : index
    %33 = vector.load %arg2[%c35, %c0_19, %c0_20] : memref<55x16x128xf32, #tpu.memory_space<vmem>>, vector<1x16x128xf32>
    %34 = vector.shape_cast %33 : vector<1x16x128xf32> to vector<16x128xf32>
    %35 = arith.subf %32, %34 : vector<16x128xf32>
    %36 = arith.mulf %35, %35 : vector<16x128xf32>
    %37 = arith.addf %30, %36 : vector<16x128xf32>
    %c12 = arith.constant 12 : index
    %c0_21 = arith.constant 0 : index
    %c0_22 = arith.constant 0 : index
    %38 = vector.load %arg2[%c12, %c0_21, %c0_22] : memref<55x16x128xf32, #tpu.memory_space<vmem>>, vector<1x16x128xf32>
    %39 = vector.shape_cast %38 : vector<1x16x128xf32> to vector<16x128xf32>
    %c36 = arith.constant 36 : index
    %c0_23 = arith.constant 0 : index
    %c0_24 = arith.constant 0 : index
    %40 = vector.load %arg2[%c36, %c0_23, %c0_24] : memref<55x16x128xf32, #tpu.memory_space<vmem>>, vector<1x16x128xf32>
    %41 = vector.shape_cast %40 : vector<1x16x128xf32> to vector<16x128xf32>
    %42 = arith.subf %39, %41 : vector<16x128xf32>
    %43 = arith.mulf %42, %42 : vector<16x128xf32>
    %44 = arith.addf %37, %43 : vector<16x128xf32>
    %c13 = arith.constant 13 : index
    %c0_25 = arith.constant 0 : index
    %c0_26 = arith.constant 0 : index
    %45 = vector.load %arg2[%c13, %c0_25, %c0_26] : memref<55x16x128xf32, #tpu.memory_space<vmem>>, vector<1x16x128xf32>
    %46 = vector.shape_cast %45 : vector<1x16x128xf32> to vector<16x128xf32>
    %c37 = arith.constant 37 : index
    %c0_27 = arith.constant 0 : index
    %c0_28 = arith.constant 0 : index
    %47 = vector.load %arg2[%c37, %c0_27, %c0_28] : memref<55x16x128xf32, #tpu.memory_space<vmem>>, vector<1x16x128xf32>
    %48 = vector.shape_cast %47 : vector<1x16x128xf32> to vector<16x128xf32>
    %49 = arith.subf %46, %48 : vector<16x128xf32>
    %50 = arith.mulf %49, %49 : vector<16x128xf32>
    %51 = arith.addf %44, %50 : vector<16x128xf32>
    %c14 = arith.constant 14 : index
    %c0_29 = arith.constant 0 : index
    %c0_30 = arith.constant 0 : index
    %52 = vector.load %arg2[%c14, %c0_29, %c0_30] : memref<55x16x128xf32, #tpu.memory_space<vmem>>, vector<1x16x128xf32>
    %53 = vector.shape_cast %52 : vector<1x16x128xf32> to vector<16x128xf32>
    %c38 = arith.constant 38 : index
    %c0_31 = arith.constant 0 : index
    %c0_32 = arith.constant 0 : index
    %54 = vector.load %arg2[%c38, %c0_31, %c0_32] : memref<55x16x128xf32, #tpu.memory_space<vmem>>, vector<1x16x128xf32>
    %55 = vector.shape_cast %54 : vector<1x16x128xf32> to vector<16x128xf32>
    %56 = arith.subf %53, %55 : vector<16x128xf32>
    %57 = arith.mulf %56, %56 : vector<16x128xf32>
    %58 = arith.addf %51, %57 : vector<16x128xf32>
    %c15 = arith.constant 15 : index
    %c0_33 = arith.constant 0 : index
    %c0_34 = arith.constant 0 : index
    %59 = vector.load %arg2[%c15, %c0_33, %c0_34] : memref<55x16x128xf32, #tpu.memory_space<vmem>>, vector<1x16x128xf32>
    %60 = vector.shape_cast %59 : vector<1x16x128xf32> to vector<16x128xf32>
    %c39 = arith.constant 39 : index
    %c0_35 = arith.constant 0 : index
    %c0_36 = arith.constant 0 : index
    %61 = vector.load %arg2[%c39, %c0_35, %c0_36] : memref<55x16x128xf32, #tpu.memory_space<vmem>>, vector<1x16x128xf32>
    %62 = vector.shape_cast %61 : vector<1x16x128xf32> to vector<16x128xf32>
    %63 = arith.subf %60, %62 : vector<16x128xf32>
    %64 = arith.mulf %63, %63 : vector<16x128xf32>
    %65 = arith.addf %58, %64 : vector<16x128xf32>
    %c16 = arith.constant 16 : index
    %c0_37 = arith.constant 0 : index
    %c0_38 = arith.constant 0 : index
    %66 = vector.load %arg2[%c16, %c0_37, %c0_38] : memref<55x16x128xf32, #tpu.memory_space<vmem>>, vector<1x16x128xf32>
    %67 = vector.shape_cast %66 : vector<1x16x128xf32> to vector<16x128xf32>
    %c40 = arith.constant 40 : index
    %c0_39 = arith.constant 0 : index
    %c0_40 = arith.constant 0 : index
    %68 = vector.load %arg2[%c40, %c0_39, %c0_40] : memref<55x16x128xf32, #tpu.memory_space<vmem>>, vector<1x16x128xf32>
    %69 = vector.shape_cast %68 : vector<1x16x128xf32> to vector<16x128xf32>
    %70 = arith.subf %67, %69 : vector<16x128xf32>
    %71 = arith.mulf %70, %70 : vector<16x128xf32>
    %72 = arith.addf %65, %71 : vector<16x128xf32>
    %c17 = arith.constant 17 : index
    %c0_41 = arith.constant 0 : index
    %c0_42 = arith.constant 0 : index
    %73 = vector.load %arg2[%c17, %c0_41, %c0_42] : memref<55x16x128xf32, #tpu.memory_space<vmem>>, vector<1x16x128xf32>
    %74 = vector.shape_cast %73 : vector<1x16x128xf32> to vector<16x128xf32>
    %c41 = arith.constant 41 : index
    %c0_43 = arith.constant 0 : index
    %c0_44 = arith.constant 0 : index
    %75 = vector.load %arg2[%c41, %c0_43, %c0_44] : memref<55x16x128xf32, #tpu.memory_space<vmem>>, vector<1x16x128xf32>
    %76 = vector.shape_cast %75 : vector<1x16x128xf32> to vector<16x128xf32>
    %77 = arith.subf %74, %76 : vector<16x128xf32>
    %78 = arith.mulf %77, %77 : vector<16x128xf32>
    %79 = arith.addf %72, %78 : vector<16x128xf32>
    %c18 = arith.constant 18 : index
    %c0_45 = arith.constant 0 : index
    %c0_46 = arith.constant 0 : index
    %80 = vector.load %arg2[%c18, %c0_45, %c0_46] : memref<55x16x128xf32, #tpu.memory_space<vmem>>, vector<1x16x128xf32>
    %81 = vector.shape_cast %80 : vector<1x16x128xf32> to vector<16x128xf32>
    %c42 = arith.constant 42 : index
    %c0_47 = arith.constant 0 : index
    %c0_48 = arith.constant 0 : index
    %82 = vector.load %arg2[%c42, %c0_47, %c0_48] : memref<55x16x128xf32, #tpu.memory_space<vmem>>, vector<1x16x128xf32>
    %83 = vector.shape_cast %82 : vector<1x16x128xf32> to vector<16x128xf32>
    %84 = arith.subf %81, %83 : vector<16x128xf32>
    %85 = arith.mulf %84, %84 : vector<16x128xf32>
    %86 = arith.addf %79, %85 : vector<16x128xf32>
    %c19 = arith.constant 19 : index
    %c0_49 = arith.constant 0 : index
    %c0_50 = arith.constant 0 : index
    %87 = vector.load %arg2[%c19, %c0_49, %c0_50] : memref<55x16x128xf32, #tpu.memory_space<vmem>>, vector<1x16x128xf32>
    %88 = vector.shape_cast %87 : vector<1x16x128xf32> to vector<16x128xf32>
    %c43 = arith.constant 43 : index
    %c0_51 = arith.constant 0 : index
    %c0_52 = arith.constant 0 : index
    %89 = vector.load %arg2[%c43, %c0_51, %c0_52] : memref<55x16x128xf32, #tpu.memory_space<vmem>>, vector<1x16x128xf32>
    %90 = vector.shape_cast %89 : vector<1x16x128xf32> to vector<16x128xf32>
    %91 = arith.subf %88, %90 : vector<16x128xf32>
    %92 = arith.mulf %91, %91 : vector<16x128xf32>
    %93 = arith.addf %86, %92 : vector<16x128xf32>
    %c20 = arith.constant 20 : index
    %c0_53 = arith.constant 0 : index
    %c0_54 = arith.constant 0 : index
    %94 = vector.load %arg2[%c20, %c0_53, %c0_54] : memref<55x16x128xf32, #tpu.memory_space<vmem>>, vector<1x16x128xf32>
    %95 = vector.shape_cast %94 : vector<1x16x128xf32> to vector<16x128xf32>
    %c44 = arith.constant 44 : index
    %c0_55 = arith.constant 0 : index
    %c0_56 = arith.constant 0 : index
    %96 = vector.load %arg2[%c44, %c0_55, %c0_56] : memref<55x16x128xf32, #tpu.memory_space<vmem>>, vector<1x16x128xf32>
    %97 = vector.shape_cast %96 : vector<1x16x128xf32> to vector<16x128xf32>
    %98 = arith.subf %95, %97 : vector<16x128xf32>
    %99 = arith.mulf %98, %98 : vector<16x128xf32>
    %100 = arith.addf %93, %99 : vector<16x128xf32>
    %c21 = arith.constant 21 : index
    %c0_57 = arith.constant 0 : index
    %c0_58 = arith.constant 0 : index
    %101 = vector.load %arg2[%c21, %c0_57, %c0_58] : memref<55x16x128xf32, #tpu.memory_space<vmem>>, vector<1x16x128xf32>
    %102 = vector.shape_cast %101 : vector<1x16x128xf32> to vector<16x128xf32>
    %c45 = arith.constant 45 : index
    %c0_59 = arith.constant 0 : index
    %c0_60 = arith.constant 0 : index
    %103 = vector.load %arg2[%c45, %c0_59, %c0_60] : memref<55x16x128xf32, #tpu.memory_space<vmem>>, vector<1x16x128xf32>
    %104 = vector.shape_cast %103 : vector<1x16x128xf32> to vector<16x128xf32>
    %105 = arith.subf %102, %104 : vector<16x128xf32>
    %106 = arith.mulf %105, %105 : vector<16x128xf32>
    %107 = arith.addf %100, %106 : vector<16x128xf32>
    %c22 = arith.constant 22 : index
    %c0_61 = arith.constant 0 : index
    %c0_62 = arith.constant 0 : index
    %108 = vector.load %arg2[%c22, %c0_61, %c0_62] : memref<55x16x128xf32, #tpu.memory_space<vmem>>, vector<1x16x128xf32>
    %109 = vector.shape_cast %108 : vector<1x16x128xf32> to vector<16x128xf32>
    %c46 = arith.constant 46 : index
    %c0_63 = arith.constant 0 : index
    %c0_64 = arith.constant 0 : index
    %110 = vector.load %arg2[%c46, %c0_63, %c0_64] : memref<55x16x128xf32, #tpu.memory_space<vmem>>, vector<1x16x128xf32>
    %111 = vector.shape_cast %110 : vector<1x16x128xf32> to vector<16x128xf32>
    %112 = arith.subf %109, %111 : vector<16x128xf32>
    %113 = arith.mulf %112, %112 : vector<16x128xf32>
    %114 = arith.addf %107, %113 : vector<16x128xf32>
    %c23 = arith.constant 23 : index
    %c0_65 = arith.constant 0 : index
    %c0_66 = arith.constant 0 : index
    %115 = vector.load %arg2[%c23, %c0_65, %c0_66] : memref<55x16x128xf32, #tpu.memory_space<vmem>>, vector<1x16x128xf32>
    %116 = vector.shape_cast %115 : vector<1x16x128xf32> to vector<16x128xf32>
    %c47 = arith.constant 47 : index
    %c0_67 = arith.constant 0 : index
    %c0_68 = arith.constant 0 : index
    %117 = vector.load %arg2[%c47, %c0_67, %c0_68] : memref<55x16x128xf32, #tpu.memory_space<vmem>>, vector<1x16x128xf32>
    %118 = vector.shape_cast %117 : vector<1x16x128xf32> to vector<16x128xf32>
    %119 = arith.subf %116, %118 : vector<16x128xf32>
    %120 = arith.mulf %119, %119 : vector<16x128xf32>
    %121 = arith.addf %114, %120 : vector<16x128xf32>
    %c24 = arith.constant 24 : index
    %c0_69 = arith.constant 0 : index
    %c0_70 = arith.constant 0 : index
    %122 = vector.load %arg2[%c24, %c0_69, %c0_70] : memref<55x16x128xf32, #tpu.memory_space<vmem>>, vector<1x16x128xf32>
    %123 = vector.shape_cast %122 : vector<1x16x128xf32> to vector<16x128xf32>
    %c48 = arith.constant 48 : index
    %c0_71 = arith.constant 0 : index
    %c0_72 = arith.constant 0 : index
    %124 = vector.load %arg2[%c48, %c0_71, %c0_72] : memref<55x16x128xf32, #tpu.memory_space<vmem>>, vector<1x16x128xf32>
    %125 = vector.shape_cast %124 : vector<1x16x128xf32> to vector<16x128xf32>
    %126 = arith.subf %123, %125 : vector<16x128xf32>
    %127 = arith.mulf %126, %126 : vector<16x128xf32>
    %128 = arith.addf %121, %127 : vector<16x128xf32>
    %c25 = arith.constant 25 : index
    %c0_73 = arith.constant 0 : index
    %c0_74 = arith.constant 0 : index
    %129 = vector.load %arg2[%c25, %c0_73, %c0_74] : memref<55x16x128xf32, #tpu.memory_space<vmem>>, vector<1x16x128xf32>
    %130 = vector.shape_cast %129 : vector<1x16x128xf32> to vector<16x128xf32>
    %c49 = arith.constant 49 : index
    %c0_75 = arith.constant 0 : index
    %c0_76 = arith.constant 0 : index
    %131 = vector.load %arg2[%c49, %c0_75, %c0_76] : memref<55x16x128xf32, #tpu.memory_space<vmem>>, vector<1x16x128xf32>
    %132 = vector.shape_cast %131 : vector<1x16x128xf32> to vector<16x128xf32>
    %133 = arith.subf %130, %132 : vector<16x128xf32>
    %134 = arith.mulf %133, %133 : vector<16x128xf32>
    %135 = arith.addf %128, %134 : vector<16x128xf32>
    %c26 = arith.constant 26 : index
    %c0_77 = arith.constant 0 : index
    %c0_78 = arith.constant 0 : index
    %136 = vector.load %arg2[%c26, %c0_77, %c0_78] : memref<55x16x128xf32, #tpu.memory_space<vmem>>, vector<1x16x128xf32>
    %137 = vector.shape_cast %136 : vector<1x16x128xf32> to vector<16x128xf32>
    %c50 = arith.constant 50 : index
    %c0_79 = arith.constant 0 : index
    %c0_80 = arith.constant 0 : index
    %138 = vector.load %arg2[%c50, %c0_79, %c0_80] : memref<55x16x128xf32, #tpu.memory_space<vmem>>, vector<1x16x128xf32>
    %139 = vector.shape_cast %138 : vector<1x16x128xf32> to vector<16x128xf32>
    %140 = arith.subf %137, %139 : vector<16x128xf32>
    %141 = arith.mulf %140, %140 : vector<16x128xf32>
    %142 = arith.addf %135, %141 : vector<16x128xf32>
    %c27 = arith.constant 27 : index
    %c0_81 = arith.constant 0 : index
    %c0_82 = arith.constant 0 : index
    %143 = vector.load %arg2[%c27, %c0_81, %c0_82] : memref<55x16x128xf32, #tpu.memory_space<vmem>>, vector<1x16x128xf32>
    %144 = vector.shape_cast %143 : vector<1x16x128xf32> to vector<16x128xf32>
    %c51 = arith.constant 51 : index
    %c0_83 = arith.constant 0 : index
    %c0_84 = arith.constant 0 : index
    %145 = vector.load %arg2[%c51, %c0_83, %c0_84] : memref<55x16x128xf32, #tpu.memory_space<vmem>>, vector<1x16x128xf32>
    %146 = vector.shape_cast %145 : vector<1x16x128xf32> to vector<16x128xf32>
    %147 = arith.subf %144, %146 : vector<16x128xf32>
    %148 = arith.mulf %147, %147 : vector<16x128xf32>
    %149 = arith.addf %142, %148 : vector<16x128xf32>
    %c28 = arith.constant 28 : index
    %c0_85 = arith.constant 0 : index
    %c0_86 = arith.constant 0 : index
    %150 = vector.load %arg2[%c28, %c0_85, %c0_86] : memref<55x16x128xf32, #tpu.memory_space<vmem>>, vector<1x16x128xf32>
    %151 = vector.shape_cast %150 : vector<1x16x128xf32> to vector<16x128xf32>
    %c52 = arith.constant 52 : index
    %c0_87 = arith.constant 0 : index
    %c0_88 = arith.constant 0 : index
    %152 = vector.load %arg2[%c52, %c0_87, %c0_88] : memref<55x16x128xf32, #tpu.memory_space<vmem>>, vector<1x16x128xf32>
    %153 = vector.shape_cast %152 : vector<1x16x128xf32> to vector<16x128xf32>
    %154 = arith.subf %151, %153 : vector<16x128xf32>
    %155 = arith.mulf %154, %154 : vector<16x128xf32>
    %156 = arith.addf %149, %155 : vector<16x128xf32>
    %c29 = arith.constant 29 : index
    %c0_89 = arith.constant 0 : index
    %c0_90 = arith.constant 0 : index
    %157 = vector.load %arg2[%c29, %c0_89, %c0_90] : memref<55x16x128xf32, #tpu.memory_space<vmem>>, vector<1x16x128xf32>
    %158 = vector.shape_cast %157 : vector<1x16x128xf32> to vector<16x128xf32>
    %c53 = arith.constant 53 : index
    %c0_91 = arith.constant 0 : index
    %c0_92 = arith.constant 0 : index
    %159 = vector.load %arg2[%c53, %c0_91, %c0_92] : memref<55x16x128xf32, #tpu.memory_space<vmem>>, vector<1x16x128xf32>
    %160 = vector.shape_cast %159 : vector<1x16x128xf32> to vector<16x128xf32>
    %161 = arith.subf %158, %160 : vector<16x128xf32>
    %162 = arith.mulf %161, %161 : vector<16x128xf32>
    %163 = arith.addf %156, %162 : vector<16x128xf32>
    %c3 = arith.constant 3 : index
    %c0_93 = arith.constant 0 : index
    %c0_94 = arith.constant 0 : index
    %164 = vector.load %arg4[%c3, %c0_93, %c0_94] : memref<8x16x128xf32, #tpu.memory_space<vmem>>, vector<1x16x128xf32>
    %165 = vector.shape_cast %164 : vector<1x16x128xf32> to vector<16x128xf32>
    %166 = arith.mulf %4, %163 : vector<16x128xf32>
    %167 = arith.addf %165, %166 : vector<16x128xf32>
    %c3_95 = arith.constant 3 : index
    %c0_96 = arith.constant 0 : index
    %c0_97 = arith.constant 0 : index
    %168 = vector.load %arg4[%c3_95, %c0_96, %c0_97] : memref<8x16x128xf32, #tpu.memory_space<vmem>>, vector<1x16x128xf32>
    %169 = vector.shape_cast %168 : vector<1x16x128xf32> to vector<16x128xf32>
    %170 = vector.shape_cast %167 : vector<16x128xf32> to vector<1x16x128xf32>
    tpu.vector_store %arg4[%c3_95, %c0_96, %c0_97], %170 {strides = array<i32>} : memref<8x16x128xf32, #tpu.memory_space<vmem>>, vector<1x16x128xf32>,
    %c30 = arith.constant 30 : index
    %c0_98 = arith.constant 0 : index
    %c0_99 = arith.constant 0 : index
    %171 = vector.load %arg2[%c30, %c0_98, %c0_99] : memref<55x16x128xf32, #tpu.memory_space<vmem>>, vector<1x16x128xf32>
    %172 = vector.shape_cast %171 : vector<1x16x128xf32> to vector<16x128xf32>
    %c31 = arith.constant 31 : index
    %c0_100 = arith.constant 0 : index
    %c0_101 = arith.constant 0 : index
    %173 = vector.load %arg2[%c31, %c0_100, %c0_101] : memref<55x16x128xf32, #tpu.memory_space<vmem>>, vector<1x16x128xf32>
    %174 = vector.shape_cast %173 : vector<1x16x128xf32> to vector<16x128xf32>
    %c32 = arith.constant 32 : index
    %c0_102 = arith.constant 0 : index
    %c0_103 = arith.constant 0 : index
    %175 = vector.load %arg2[%c32, %c0_102, %c0_103] : memref<55x16x128xf32, #tpu.memory_space<vmem>>, vector<1x16x128xf32>
    %176 = vector.shape_cast %175 : vector<1x16x128xf32> to vector<16x128xf32>
    %c33 = arith.constant 33 : index
    %c0_104 = arith.constant 0 : index
    %c0_105 = arith.constant 0 : index
    %177 = vector.load %arg2[%c33, %c0_104, %c0_105] : memref<55x16x128xf32, #tpu.memory_space<vmem>>, vector<1x16x128xf32>
    %178 = vector.shape_cast %177 : vector<1x16x128xf32> to vector<16x128xf32>
    %cst_106 = arith.constant 2.500000e-01 : f32
    %179 = vector.broadcast %cst_106 : f32 to vector<16x128xf32>
    %180 = arith.mulf %172, %179 : vector<16x128xf32>
    %cst_107 = arith.constant 2.500000e-01 : f32
    %181 = vector.broadcast %cst_107 : f32 to vector<16x128xf32>
    %182 = arith.mulf %174, %181 : vector<16x128xf32>
    %cst_108 = arith.constant 5.000000e-01 : f32
    %183 = vector.broadcast %cst_108 : f32 to vector<16x128xf32>
    %184 = arith.mulf %183, %176 : vector<16x128xf32>
    %185 = arith.subf %180, %184 : vector<16x128xf32>
    %cst_109 = arith.constant 5.000000e-01 : f32
    %186 = vector.broadcast %cst_109 : f32 to vector<16x128xf32>
    %187 = arith.mulf %186, %178 : vector<16x128xf32>
    %188 = arith.subf %182, %187 : vector<16x128xf32>
    %cst_110 = arith.constant 5.000000e-01 : f32
    %189 = vector.broadcast %cst_110 : f32 to vector<16x128xf32>
    %190 = arith.mulf %189, %176 : vector<16x128xf32>
    %191 = arith.addf %180, %190 : vector<16x128xf32>
    %cst_111 = arith.constant 5.000000e-01 : f32
    %192 = vector.broadcast %cst_111 : f32 to vector<16x128xf32>
    %193 = arith.mulf %192, %178 : vector<16x128xf32>
    %194 = arith.addf %182, %193 : vector<16x128xf32>
    %195 = arith.subf %191, %185 : vector<16x128xf32>
    %196 = arith.subf %194, %188 : vector<16x128xf32>
    %197 = arith.mulf %195, %196 : vector<16x128xf32>
    %c0_112 = arith.constant 0 : index
    %c0_113 = arith.constant 0 : index
    %c0_114 = arith.constant 0 : index
    %198 = vector.load %arg2[%c0_112, %c0_113, %c0_114] : memref<55x16x128xf32, #tpu.memory_space<vmem>>, vector<1x16x128xf32>
    %199 = vector.shape_cast %198 : vector<1x16x128xf32> to vector<16x128xf32>
    %c1 = arith.constant 1 : index
    %c0_115 = arith.constant 0 : index
    %c0_116 = arith.constant 0 : index
    %200 = vector.load %arg2[%c1, %c0_115, %c0_116] : memref<55x16x128xf32, #tpu.memory_space<vmem>>, vector<1x16x128xf32>
    %201 = vector.shape_cast %200 : vector<1x16x128xf32> to vector<16x128xf32>
    %c2_117 = arith.constant 2 : index
    %c0_118 = arith.constant 0 : index
    %c0_119 = arith.constant 0 : index
    %202 = vector.load %arg2[%c2_117, %c0_118, %c0_119] : memref<55x16x128xf32, #tpu.memory_space<vmem>>, vector<1x16x128xf32>
    %203 = vector.shape_cast %202 : vector<1x16x128xf32> to vector<16x128xf32>
    %c3_120 = arith.constant 3 : index
    %c0_121 = arith.constant 0 : index
    %c0_122 = arith.constant 0 : index
    %204 = vector.load %arg2[%c3_120, %c0_121, %c0_122] : memref<55x16x128xf32, #tpu.memory_space<vmem>>, vector<1x16x128xf32>
    %205 = vector.shape_cast %204 : vector<1x16x128xf32> to vector<16x128xf32>
    %c5 = arith.constant 5 : index
    %c0_123 = arith.constant 0 : index
    %c0_124 = arith.constant 0 : index
    %206 = vector.load %arg2[%c5, %c0_123, %c0_124] : memref<55x16x128xf32, #tpu.memory_space<vmem>>, vector<1x16x128xf32>
    %207 = vector.shape_cast %206 : vector<1x16x128xf32> to vector<16x128xf32>
    %c6 = arith.constant 6 : index
    %c0_125 = arith.constant 0 : index
    %c0_126 = arith.constant 0 : index
    %208 = vector.load %arg2[%c6, %c0_125, %c0_126] : memref<55x16x128xf32, #tpu.memory_space<vmem>>, vector<1x16x128xf32>
    %209 = vector.shape_cast %208 : vector<1x16x128xf32> to vector<16x128xf32>
    %c7 = arith.constant 7 : index
    %c0_127 = arith.constant 0 : index
    %c0_128 = arith.constant 0 : index
    %210 = vector.load %arg2[%c7, %c0_127, %c0_128] : memref<55x16x128xf32, #tpu.memory_space<vmem>>, vector<1x16x128xf32>
    %211 = vector.shape_cast %210 : vector<1x16x128xf32> to vector<16x128xf32>
    %c8 = arith.constant 8 : index
    %c0_129 = arith.constant 0 : index
    %c0_130 = arith.constant 0 : index
    %212 = vector.load %arg2[%c8, %c0_129, %c0_130] : memref<55x16x128xf32, #tpu.memory_space<vmem>>, vector<1x16x128xf32>
    %213 = vector.shape_cast %212 : vector<1x16x128xf32> to vector<16x128xf32>
    %cst_131 = arith.constant 2.500000e-01 : f32
    %214 = vector.broadcast %cst_131 : f32 to vector<16x128xf32>
    %215 = arith.mulf %199, %214 : vector<16x128xf32>
    %cst_132 = arith.constant 2.500000e-01 : f32
    %216 = vector.broadcast %cst_132 : f32 to vector<16x128xf32>
    %217 = arith.mulf %201, %216 : vector<16x128xf32>
    %cst_133 = arith.constant 5.000000e-01 : f32
    %218 = vector.broadcast %cst_133 : f32 to vector<16x128xf32>
    %219 = arith.mulf %218, %203 : vector<16x128xf32>
    %220 = arith.subf %215, %219 : vector<16x128xf32>
    %cst_134 = arith.constant 5.000000e-01 : f32
    %221 = vector.broadcast %cst_134 : f32 to vector<16x128xf32>
    %222 = arith.mulf %221, %205 : vector<16x128xf32>
    %223 = arith.subf %217, %222 : vector<16x128xf32>
    %cst_135 = arith.constant 5.000000e-01 : f32
    %224 = vector.broadcast %cst_135 : f32 to vector<16x128xf32>
    %225 = arith.mulf %224, %203 : vector<16x128xf32>
    %226 = arith.addf %215, %225 : vector<16x128xf32>
    %cst_136 = arith.constant 5.000000e-01 : f32
    %227 = vector.broadcast %cst_136 : f32 to vector<16x128xf32>
    %228 = arith.mulf %227, %205 : vector<16x128xf32>
    %229 = arith.addf %217, %228 : vector<16x128xf32>
    %230 = arith.minimumf %191, %226 : vector<16x128xf32>
    %231 = arith.maximumf %185, %220 : vector<16x128xf32>
    %232 = arith.subf %230, %231 : vector<16x128xf32>
    %cst_137 = arith.constant 0.000000e+00 : f32
    %233 = vector.broadcast %cst_137 : f32 to vector<16x128xf32>
    %234 = arith.maximumf %232, %233 : vector<16x128xf32>
    %235 = arith.minimumf %194, %229 : vector<16x128xf32>
    %236 = arith.maximumf %188, %223 : vector<16x128xf32>
    %237 = arith.subf %235, %236 : vector<16x128xf32>
    %cst_138 = arith.constant 0.000000e+00 : f32
    %238 = vector.broadcast %cst_138 : f32 to vector<16x128xf32>
    %239 = arith.maximumf %237, %238 : vector<16x128xf32>
    %240 = arith.mulf %234, %239 : vector<16x128xf32>
    %241 = arith.subf %226, %220 : vector<16x128xf32>
    %242 = arith.subf %229, %223 : vector<16x128xf32>
    %243 = arith.mulf %241, %242 : vector<16x128xf32>
    %244 = arith.addf %197, %243 : vector<16x128xf32>
    %245 = arith.subf %244, %240 : vector<16x128xf32>
    %cst_139 = arith.constant 1.000000e+00 : f32
    %246 = vector.broadcast %cst_139 : f32 to vector<16x128xf32>
    %247 = arith.select %6, %245, %246 : vector<16x128xi1>, vector<16x128xf32>
    %248 = tpu.reciprocal %247 {approx = true} : vector<16x128xf32> -> vector<16x128xf32>
    %249 = arith.mulf %247, %248 : vector<16x128xf32>
    %cst_140 = arith.constant 2.000000e+00 : f32
    %250 = vector.broadcast %cst_140 : f32 to vector<16x128xf32>
    %251 = arith.subf %250, %249 : vector<16x128xf32>
    %252 = arith.mulf %248, %251 : vector<16x128xf32>
    %253 = arith.mulf %240, %252 : vector<16x128xf32>
    %cst_141 = arith.constant 2.500000e-01 : f32
    %254 = vector.broadcast %cst_141 : f32 to vector<16x128xf32>
    %255 = arith.mulf %207, %254 : vector<16x128xf32>
    %cst_142 = arith.constant 2.500000e-01 : f32
    %256 = vector.broadcast %cst_142 : f32 to vector<16x128xf32>
    %257 = arith.mulf %209, %256 : vector<16x128xf32>
    %cst_143 = arith.constant 5.000000e-01 : f32
    %258 = vector.broadcast %cst_143 : f32 to vector<16x128xf32>
    %259 = arith.mulf %258, %211 : vector<16x128xf32>
    %260 = arith.subf %255, %259 : vector<16x128xf32>
    %cst_144 = arith.constant 5.000000e-01 : f32
    %261 = vector.broadcast %cst_144 : f32 to vector<16x128xf32>
    %262 = arith.mulf %261, %213 : vector<16x128xf32>
    %263 = arith.subf %257, %262 : vector<16x128xf32>
    %cst_145 = arith.constant 5.000000e-01 : f32
    %264 = vector.broadcast %cst_145 : f32 to vector<16x128xf32>
    %265 = arith.mulf %264, %211 : vector<16x128xf32>
    %266 = arith.addf %255, %265 : vector<16x128xf32>
    %cst_146 = arith.constant 5.000000e-01 : f32
    %267 = vector.broadcast %cst_146 : f32 to vector<16x128xf32>
    %268 = arith.mulf %267, %213 : vector<16x128xf32>
    %269 = arith.addf %257, %268 : vector<16x128xf32>
    %270 = arith.minimumf %191, %266 : vector<16x128xf32>
    %271 = arith.maximumf %185, %260 : vector<16x128xf32>
    %272 = arith.subf %270, %271 : vector<16x128xf32>
    %cst_147 = arith.constant 0.000000e+00 : f32
    %273 = vector.broadcast %cst_147 : f32 to vector<16x128xf32>
    %274 = arith.maximumf %272, %273 : vector<16x128xf32>
    %275 = arith.minimumf %194, %269 : vector<16x128xf32>
    %276 = arith.maximumf %188, %263 : vector<16x128xf32>
    %277 = arith.subf %275, %276 : vector<16x128xf32>
    %cst_148 = arith.constant 0.000000e+00 : f32
    %278 = vector.broadcast %cst_148 : f32 to vector<16x128xf32>
    %279 = arith.maximumf %277, %278 : vector<16x128xf32>
    %280 = arith.mulf %274, %279 : vector<16x128xf32>
    %281 = arith.subf %266, %260 : vector<16x128xf32>
    %282 = arith.subf %269, %263 : vector<16x128xf32>
    %283 = arith.mulf %281, %282 : vector<16x128xf32>
    %284 = arith.addf %197, %283 : vector<16x128xf32>
    %285 = arith.subf %284, %280 : vector<16x128xf32>
    %cst_149 = arith.constant 1.000000e+00 : f32
    %286 = vector.broadcast %cst_149 : f32 to vector<16x128xf32>
    %287 = arith.select %6, %285, %286 : vector<16x128xi1>, vector<16x128xf32>
    %288 = tpu.reciprocal %287 {approx = true} : vector<16x128xf32> -> vector<16x128xf32>
    %289 = arith.mulf %287, %288 : vector<16x128xf32>
    %cst_150 = arith.constant 2.000000e+00 : f32
    %290 = vector.broadcast %cst_150 : f32 to vector<16x128xf32>
    %291 = arith.subf %290, %289 : vector<16x128xf32>
    %292 = arith.mulf %288, %291 : vector<16x128xf32>
    %293 = arith.mulf %280, %292 : vector<16x128xf32>
    %294 = arith.cmpf ogt, %253, %293 : vector<16x128xf32>
    %295 = arith.select %294, %253, %293 : vector<16x128xi1>, vector<16x128xf32>
    %296 = arith.select %294, %199, %207 : vector<16x128xi1>, vector<16x128xf32>
    %297 = arith.select %294, %201, %209 : vector<16x128xi1>, vector<16x128xf32>
    %298 = arith.select %294, %203, %211 : vector<16x128xi1>, vector<16x128xf32>
    %299 = arith.select %294, %205, %213 : vector<16x128xi1>, vector<16x128xf32>
    %300 = arith.select %294, %8, %10 : vector<16x128xi1>, vector<16x128xf32>
    %301 = arith.subf %296, %172 : vector<16x128xf32>
    %302 = arith.subf %297, %174 : vector<16x128xf32>
    %cst_151 = arith.constant 1.000000e+00 : f32
    %303 = vector.broadcast %cst_151 : f32 to vector<16x128xf32>
    %304 = arith.select %6, %298, %303 : vector<16x128xi1>, vector<16x128xf32>
    %305 = math.sqrt %304 : vector<16x128xf32>
    %cst_152 = arith.constant 1.000000e+00 : f32
    %306 = vector.broadcast %cst_152 : f32 to vector<16x128xf32>
    %307 = arith.select %6, %176, %306 : vector<16x128xi1>, vector<16x128xf32>
    %308 = math.sqrt %307 : vector<16x128xf32>
    %309 = arith.subf %305, %308 : vector<16x128xf32>
    %cst_153 = arith.constant 1.000000e+00 : f32
    %310 = vector.broadcast %cst_153 : f32 to vector<16x128xf32>
    %311 = arith.select %6, %299, %310 : vector<16x128xi1>, vector<16x128xf32>
    %312 = math.sqrt %311 : vector<16x128xf32>
    %cst_154 = arith.constant 1.000000e+00 : f32
    %313 = vector.broadcast %cst_154 : f32 to vector<16x128xf32>
    %314 = arith.select %6, %178, %313 : vector<16x128xi1>, vector<16x128xf32>
    %315 = math.sqrt %314 : vector<16x128xf32>
    %316 = arith.subf %312, %315 : vector<16x128xf32>
    %c0_155 = arith.constant 0 : index
    %c0_156 = arith.constant 0 : index
    %c0_157 = arith.constant 0 : index
    %317 = vector.load %arg4[%c0_155, %c0_156, %c0_157] : memref<8x16x128xf32, #tpu.memory_space<vmem>>, vector<1x16x128xf32>
    %318 = vector.shape_cast %317 : vector<1x16x128xf32> to vector<16x128xf32>
    %319 = arith.mulf %301, %301 : vector<16x128xf32>
    %320 = arith.mulf %302, %302 : vector<16x128xf32>
    %321 = arith.addf %319, %320 : vector<16x128xf32>
    %322 = arith.mulf %309, %309 : vector<16x128xf32>
    %323 = arith.addf %321, %322 : vector<16x128xf32>
    %324 = arith.mulf %316, %316 : vector<16x128xf32>
    %325 = arith.addf %323, %324 : vector<16x128xf32>
    %326 = arith.mulf %4, %325 : vector<16x128xf32>
    %327 = arith.addf %318, %326 : vector<16x128xf32>
    %c0_158 = arith.constant 0 : index
    %c0_159 = arith.constant 0 : index
    %c0_160 = arith.constant 0 : index
    %328 = vector.load %arg4[%c0_158, %c0_159, %c0_160] : memref<8x16x128xf32, #tpu.memory_space<vmem>>, vector<1x16x128xf32>
    %329 = vector.shape_cast %328 : vector<1x16x128xf32> to vector<16x128xf32>
    %330 = vector.shape_cast %327 : vector<16x128xf32> to vector<1x16x128xf32>
    tpu.vector_store %arg4[%c0_158, %c0_159, %c0_160], %330 {strides = array<i32>} : memref<8x16x128xf32, #tpu.memory_space<vmem>>, vector<1x16x128xf32>,
    %331 = arith.subf %300, %295 : vector<16x128xf32>
    %c1_161 = arith.constant 1 : index
    %c0_162 = arith.constant 0 : index
    %c0_163 = arith.constant 0 : index
    %332 = vector.load %arg4[%c1_161, %c0_162, %c0_163] : memref<8x16x128xf32, #tpu.memory_space<vmem>>, vector<1x16x128xf32>
    %333 = vector.shape_cast %332 : vector<1x16x128xf32> to vector<16x128xf32>
    %334 = arith.mulf %331, %331 : vector<16x128xf32>
    %335 = arith.mulf %4, %334 : vector<16x128xf32>
    %336 = arith.addf %333, %335 : vector<16x128xf32>
    %c1_164 = arith.constant 1 : index
    %c0_165 = arith.constant 0 : index
    %c0_166 = arith.constant 0 : index
    %337 = vector.load %arg4[%c1_164, %c0_165, %c0_166] : memref<8x16x128xf32, #tpu.memory_space<vmem>>, vector<1x16x128xf32>
    %338 = vector.shape_cast %337 : vector<1x16x128xf32> to vector<16x128xf32>
    %339 = vector.shape_cast %336 : vector<16x128xf32> to vector<1x16x128xf32>
    tpu.vector_store %arg4[%c1_164, %c0_165, %c0_166], %339 {strides = array<i32>} : memref<8x16x128xf32, #tpu.memory_space<vmem>>, vector<1x16x128xf32>,
    %c0_i32_167 = arith.constant 0 : i32
    %340 = arith.cmpi eq, %arg1, %c0_i32_167 : i32
    %341 = arith.extui %340 : i1 to i32
    %c0_i32_168 = arith.constant 0 : i32
    %342 = arith.cmpi ne, %341, %c0_i32_168 : i32
    scf.if %342 {
      %c0_169 = arith.constant 0 : index
      %c0_170 = arith.constant 0 : index
      %c0_171 = arith.constant 0 : index
      %343 = vector.load %arg4[%c0_169, %c0_170, %c0_171] : memref<8x16x128xf32, #tpu.memory_space<vmem>>, vector<8x16x128xf32>
      %cst_172 = arith.constant dense<0.000000e+00> : vector<8x128xf32>
      %344 = vector.multi_reduction <add>, %343, %cst_172 [1] : vector<8x16x128xf32> to vector<8x128xf32>
      %c0_173 = arith.constant 0 : index
      %c0_174 = arith.constant 0 : index
      %345 = vector.load %arg3[%c0_173, %c0_174] : memref<8x128xf32, #tpu.memory_space<vmem>>, vector<8x128xf32>
      tpu.vector_store %arg3[%c0_173, %c0_174], %344 {strides = array<i32>} : memref<8x128xf32, #tpu.memory_space<vmem>>, vector<8x128xf32>,
    } else {
    }
    return
  }
  func.func @transform_0(%arg0: i32, %arg1: i32) -> (i32, i32, i32) {
    %c1_i32 = arith.constant 1 : i32
    %0 = arith.muli %arg0, %c1_i32 : i32
    %1 = arith.addi %0, %arg1 : i32
    %c0_i32 = arith.constant 0 : i32
    %c0_i32_0 = arith.constant 0 : i32
    %c0_i32_1 = arith.constant 0 : i32
    return %c0_i32, %1, %c0_i32_0 : i32, i32, i32
  }
  func.func @transform_1(%arg0: i32, %arg1: i32) -> (i32, i32) {
    %c0_i32 = arith.constant 0 : i32
    %c0_i32_0 = arith.constant 0 : i32
    return %arg0, %c0_i32 : i32, i32
  }
}

</mosaic_0001>

<llo_original>
// kernel: tpu_custom_call.1
$region0: #{tpu_custom_call.1}
  #allocation0 [shape = 'u32[]', space=smem, size = 0x4, offset = 0x4, fixed_abs, tag = 'smem constant byte address 0x4 - core index']
  #allocation1 [shape = 'u32[144,128]{1,0:T(1,128)}', space=vmem, size = 0x12000, scoped, tag = 'internal scratch']
  #allocation2 [shape = 'f32[8,16,128]{2,1,0:T(8,128)}', space=vmem, size = 0x10000, scoped, tag = 'scratch operand']
  #allocation7 [shape = 's32[]', space=sflag, size = 0x4, offset = 0, fixed_abs, tag = 'sflag constant byte address 0x0 - dummy sync flag']
  %s0 = inlined_call_operand.hbm [shape: f32[55,32,128], index: 0, kind: input, shape index: {}]
  %s1 = inlined_call_operand.hbm [shape: f32[16,128], index: 1, kind: output, shape index: {}]
  %s2 = sld [smem:[#allocation0]]
  $region49: #{tpu_custom_call.1} parent=0
    _
  %s4 = ssub.s32 1, %s2
  %s5 = scalar_select 0, %s4, %s2
  $region1: #{tpu_custom_call.1} parent=0
    #allocation3 [shape = 'u8[901120]{0}', space=vmem, size = 0xdc000, scoped, tag = 'input window, operand 0']
    #allocation4 [shape = 's32[2]{0}', space=sflag, size = 0x8, scoped, tag = 'scoped memory for tpu_custom_call.1']
    #allocation5 [shape = 's32[2]{0}', space=sflag, size = 0x8, scoped, tag = 'scoped memory for tpu_custom_call.1']
    #allocation6 [shape = 'u8[8192]{0}', space=vmem, size = 0x2000, scoped, tag = 'output window, operand 0']
    %6 = vsyncpa [#allocation4], 0
    %s7 = scalar_lea.sflag [#allocation4], 1
    %8 = vsyncpa %s7, 0
    %9 = vsyncpa [#allocation5], 0
    %s10 = scalar_lea.sflag [#allocation5], 1
    %11 = vsyncpa %s10, 0
    loop: start=0, step=1, limit=4
    $region2: #{tpu_custom_call.1} parent=1 // loop_pre_header
      _
    $region3: #{tpu_custom_call.1} parent=1 // loop_header
      %s13 = sphi 0, %s17
      %p14 = scmp.ge.s32.totalorder %s13, 4
      %s20 = sphi 0, %s32
      %s21 = sphi 0, %s28
      %s22 = sphi 0, %s20
      %s23 = sphi 0, %s21
      %s24 = sphi 0, %s22
      %s25 = sphi 0, %s23
      %s37 = sphi 0, %s39
      %s40 = sphi 0, %s37
      %s41 = sphi 0, %s40
      %s57 = sphi 0, %s41
      %s63 = sphi 0, %s65
      %s66 = sphi 0, %s63
      %s67 = sphi 0, %s66
      %s83 = sphi 0, %s67
    $region4: #{tpu_custom_call.1} parent=1 // loop_header_branch
      %16 = sbr.rel (%p14) target = $region8
    $region5: #{tpu_custom_call.1} parent=1 // loop_body
      %s18 = ssub.s32 %s13, 1
      %s19 = ssub.s32 %s13, 2
      %s26 = sadd.s32 1, %s21
      %p27 = scmp.ge.s32.totalorder %s26, 1
      %s28 = scalar_select %p27, 0, %s26
      %s29 = sadd.s32 1, %s20
      %s30 = scalar_select %p27, %s29, %s20
      %p31 = scmp.ge.s32.totalorder %s30, 2
      %s32 = scalar_select %p31, 0, %s30
      %s33 = sadd.s32 %s20, %s21
      %s34 = sadd.s32 %s32, %s28
      %s35 = ssub.s32 %s33, %s34
      %p36 = scmp.eq.s32.totalorder %s35, 0
      %s38 = sadd.s32 %s37, 1
      %s39 = scalar_select %p36, %s37, %s38
      %p42 = pneg %p36
      %p43 = scmp.eq.s32.totalorder %s13, 1
      %p44 = por %p42, %p43
      %p45 = scmp.ne.s32.totalorder %s37, %s40
      %p46 = scmp.eq.s32.totalorder %s13, 0
      %p47 = por %p45, %p46
      %p48 = scmp.ne.s32.totalorder %s37, %s40
      %p49 = scmp.eq.s32.totalorder %s18, 1
      %p50 = por %p48, %p49
      %p51 = scmp.ne.s32.totalorder %s40, %s41
      %p52 = scmp.eq.s32.totalorder %s18, 0
      %p53 = por %p51, %p52
      %p54 = scmp.ne.s32.totalorder %s40, %s41
      %p55 = scmp.eq.s32.totalorder %s19, 1
      %p56 = por %p54, %p55
      %p58 = scmp.ne.s32.totalorder %s41, %s57
      %p59 = scmp.eq.s32.totalorder %s19, 0
      %p60 = por %p58, %p59
      %s61 = ssub.s32 %s20, %s32
      %p62 = scmp.eq.s32.totalorder %s61, 0
      %s64 = sadd.s32 %s63, 1
      %s65 = scalar_select %p62, %s63, %s64
      %p68 = pneg %p62
      %p69 = scmp.eq.s32.totalorder %s13, 1
      %p70 = por %p68, %p69
      %p71 = scmp.ne.s32.totalorder %s63, %s66
      %p72 = scmp.eq.s32.totalorder %s13, 0
      %p73 = por %p71, %p72
      %p74 = scmp.ne.s32.totalorder %s63, %s66
      %p75 = scmp.eq.s32.totalorder %s18, 1
      %p76 = por %p74, %p75
      %p77 = scmp.ne.s32.totalorder %s66, %s67
      %p78 = scmp.eq.s32.totalorder %s18, 0
      %p79 = por %p77, %p78
      %p80 = scmp.ne.s32.totalorder %s66, %s67
      %p81 = scmp.eq.s32.totalorder %s19, 1
      %p82 = por %p80, %p81
      %p84 = scmp.ne.s32.totalorder %s67, %s83
      %p85 = scmp.eq.s32.totalorder %s19, 0
      %p86 = por %p84, %p85
      %p87 = scmp.le.s32.totalorder 1, %s13
      %p88 = scmp.lt.s32.totalorder %s13, 3
      %p89 = pnand %p87, %p88
      %p90 = pneg %p89
      // Predicated region
      $region9: #{tpu_custom_call.1} parent=5 // pred_check
        _
      $region10: #{tpu_custom_call.1} parent=5 // pred_check_branch
        %92 = sbr.rel (%p89) target = $region12
      $region11: #{tpu_custom_call.1} parent=5 // pred_region
        %s93 = ssub.s32 %s13, 1
      $region12: #{tpu_custom_call.1} parent=5 // pred_fallthru
        _
      %p94 = scmp.lt.s32.totalorder %s13, 2
      // Predicated region
      $region13: #{tpu_custom_call.1} parent=5 // pred_check
        %p95 = pneg %p94
      $region14: #{tpu_custom_call.1} parent=5 // pred_check_branch
        %97 = sbr.rel (%p95) target = $region16
      $region15: #{tpu_custom_call.1} parent=5 // pred_region
        // Predicated region
        $region17: #{tpu_custom_call.1} parent=15 // pred_check
          %p98 = pneg %p47
        $region18: #{tpu_custom_call.1} parent=15 // pred_check_branch
          %100 = sbr.rel (%p98) target = $region20
        $region19: #{tpu_custom_call.1} parent=15 // pred_region
          #allocation8 [shape = 'u32[6]{0}', space=smem, size = 0x18, scoped, tag = 'DMA stride descriptor']
          %s101 = sand.u32 %s37, 1
          %s102 = scalar_lea.sflag [#allocation4], %s101
          %s103 = sand.u32 %s37, 1
          %s104 = smul.addr %s103, 880
          %s105 = scalar_lea.vmem [#allocation3], %s104
          %s106 = sadd.s32 %s20, %s21
          %s107 = smul.u32 2, %s106
          %s109 = ssub.s32 14080, 14080
          %110 = vsyncadd %s102, %s109
          %s111 = smul.addr %s107, 128
          %s112 = scalar_lea.hbm %s0, %s111
          %s114 = sshll.u32 1, 14
          %s115 = sxor.u32 4294967295, %s114
          %s117 = sld [smem:[#allocation0]]
          %s118 = sadd.s32 2, %s117
          %s120 = sshll.u32 7, 26
          %s121 = sxor.u32 4294967295, %s120
          %s122 = sand.u32 0, %s121
          %s123 = sshll.u32 %s118, 26
          %s124 = sor.u32 %s122, %s123
          %s125 = sshll.u32 %s105, 4
          %s126 = int_to_ptr.vmem [resolvable:$true] %s125
          %132 = sst [smem:[#allocation8]] 512
          %s133 = scalar_lea.smem [#allocation8], 1
          %134 = sst [smem:[%s133]] 256
          %s135 = scalar_lea.smem [#allocation8], 2
          %136 = sst [smem:[%s135]] 2
          %s137 = scalar_lea.smem [#allocation8], 3
          %138 = sst [smem:[%s137]] 128
          %s139 = scalar_lea.smem [#allocation8], 4
          %140 = sst [smem:[%s139]] 128
          %s141 = scalar_lea.smem [#allocation8], 5
          %142 = sst [smem:[%s141]] 8
          %144 = dma.general %s112, 14080, %s126, %s102, [#allocation7], [#allocation8], %s124, 0
        $region20: #{tpu_custom_call.1} parent=15 // pred_fallthru
          _
      $region16: #{tpu_custom_call.1} parent=5 // pred_fallthru
        _
      %p145 = scmp.le.s32.totalorder 1, %s13
      %p146 = scmp.lt.s32.totalorder %s13, 3
      %p147 = pnand %p145, %p146
      %p148 = pneg %p147
      // Predicated region
      $region21: #{tpu_custom_call.1} parent=5 // pred_check
        _
      $region22: #{tpu_custom_call.1} parent=5 // pred_check_branch
        %150 = sbr.rel (%p147) target = $region24
      $region23: #{tpu_custom_call.1} parent=5 // pred_region
        %s151 = ssub.s32 %s13, 1
        %s152 = sand.u32 %s40, 1
        %s153 = scalar_lea.sflag [#allocation4], %s152
        %s154 = sand.u32 %s40, 1
        %s155 = smul.addr %s154, 880
        %s156 = scalar_lea.vmem [#allocation3], %s155
        // Predicated region
        $region25: #{tpu_custom_call.1} parent=23 // pred_check
          %p157 = pneg %p53
        $region26: #{tpu_custom_call.1} parent=23 // pred_check_branch
          %159 = sbr.rel (%p157) target = $region28
        $region27: #{tpu_custom_call.1} parent=23 // pred_region
          %160 = dma.done %s153, 14080
        $region28: #{tpu_custom_call.1} parent=23 // pred_fallthru
          _
        %s161 = sand.u32 %s40, 1
        %s162 = scalar_lea.sflag [#allocation4], %s161
        %s163 = sand.u32 %s40, 1
        %s164 = smul.addr %s163, 880
        %s165 = scalar_lea.vmem [#allocation3], %s164
        %p166 = pneg %p53
        %p167 = pneg %p50
        %p168 = pneg %p79
        %p169 = pneg %p76
        %s170 = sand.u32 %s66, 1
        %s171 = scalar_lea.sflag [#allocation5], %s170
        %s172 = sand.u32 %s66, 1
        %s173 = smul.addr %s172, 8
        %s174 = scalar_lea.vmem [#allocation6], %s173
        %s175 = sadd.s32 %s22, %s23
        %s176 = smul.u32 2, %s175
        %p177 = scmp.eq.s32.totalorder %s23, 0
        // Predicated region
        $region29: #{tpu_custom_call.1} parent=23 // pred_check
          %p178 = pneg %p177
        $region30: #{tpu_custom_call.1} parent=23 // pred_check_branch
          %180 = sbr.rel (%p178) target = $region32
        $region31: #{tpu_custom_call.1} parent=23 // pred_region
          %181 = vst [vmem:[#allocation2] sm:$0xff] 0.0
          %182 = vst [vmem:[#allocation2 + $0x8] sm:$0xff] 0.0
          %183 = vst [vmem:[#allocation2 + $0x10] sm:$0xff] 0.0
          %184 = vst [vmem:[#allocation2 + $0x18] sm:$0xff] 0.0
          %185 = vst [vmem:[#allocation2 + $0x20] sm:$0xff] 0.0
          %186 = vst [vmem:[#allocation2 + $0x28] sm:$0xff] 0.0
          %187 = vst [vmem:[#allocation2 + $0x30] sm:$0xff] 0.0
          %188 = vst [vmem:[#allocation2 + $0x38] sm:$0xff] 0.0
          %189 = vst [vmem:[#allocation2 + $0x40] sm:$0xff] 0.0
          %190 = vst [vmem:[#allocation2 + $0x48] sm:$0xff] 0.0
          %191 = vst [vmem:[#allocation2 + $0x50] sm:$0xff] 0.0
          %192 = vst [vmem:[#allocation2 + $0x58] sm:$0xff] 0.0
          %193 = vst [vmem:[#allocation2 + $0x60] sm:$0xff] 0.0
          %194 = vst [vmem:[#allocation2 + $0x68] sm:$0xff] 0.0
          %195 = vst [vmem:[#allocation2 + $0x70] sm:$0xff] 0.0
          %196 = vst [vmem:[#allocation2 + $0x78] sm:$0xff] 0.0
        $region32: #{tpu_custom_call.1} parent=23 // pred_fallthru
          _
        %s197 = scalar_lea.vmem %s156, 864 [#allocation3]
        %v198 = vld [vmem:[%s197] sm:$0xff]
        %v199 = vld [vmem:[%s197 + $0x8] sm:$0xff]
        %vm200 = vcmp.gt.f32.partialorder %v198, 0.0
        %vm201 = vcmp.gt.f32.partialorder %v199, 0.0
        %s202 = scalar_lea.vmem %s156, 64 [#allocation3]
        %v203 = vld [vmem:[%s202] sm:$0xff]
        %v204 = vld [vmem:[%s202 + $0x8] sm:$0xff]
        %s205 = scalar_lea.vmem %s156, 144 [#allocation3]
        %v206 = vld [vmem:[%s205] sm:$0xff]
        %v207 = vld [vmem:[%s205 + $0x8] sm:$0xff]
        %s208 = scalar_lea.vmem [#allocation2], 32
        %v209 = vld [vmem:[%s208] sm:$0xff]
        %v210 = vld [vmem:[%s208 + $0x8] sm:$0xff]
        %v211 = vsub.f32 1.0, %v198
        %v212 = vsub.f32 1.0, %v199
        %v213 = vmul.f32 %v203, %v203
        %v214 = vmul.f32 %v204, %v204
        %v215 = vmul.f32 %v206, %v206
        %v216 = vmul.f32 %v207, %v207
        %v217 = vadd.f32 %v213, %v215
        %v218 = vadd.f32 %v214, %v216
        %v219 = vmul.f32 %v211, %v217
        %v220 = vmul.f32 %v212, %v218
        %v221 = vadd.f32 %v209, %v219
        %v222 = vadd.f32 %v210, %v220
        %223 = vst [vmem:[%s208] sm:$0xff] %v221
        %224 = vst [vmem:[%s208 + $0x8] sm:$0xff] %v222
        %s225 = scalar_lea.vmem %s156, 160 [#allocation3]
        %v226 = vld [vmem:[%s225] sm:$0xff]
        %v227 = vld [vmem:[%s225 + $0x8] sm:$0xff]
        %s228 = scalar_lea.vmem %s156, 544 [#allocation3]
        %v229 = vld [vmem:[%s228] sm:$0xff]
        %v230 = vld [vmem:[%s228 + $0x8] sm:$0xff]
        %v231 = vsub.f32 %v226, %v229
        %v232 = vsub.f32 %v227, %v230
        %v233 = vmul.f32 %v231, %v231
        %v234 = vmul.f32 %v232, %v232
        %v235 = vadd.f32 %v233, 0.0
        %v236 = vadd.f32 %v234, 0.0
        %s237 = scalar_lea.vmem %s156, 176 [#allocation3]
        %v238 = vld [vmem:[%s237] sm:$0xff]
        %v239 = vld [vmem:[%s237 + $0x8] sm:$0xff]
        %s240 = scalar_lea.vmem %s156, 560 [#allocation3]
        %v241 = vld [vmem:[%s240] sm:$0xff]
        %v242 = vld [vmem:[%s240 + $0x8] sm:$0xff]
        %v243 = vsub.f32 %v238, %v241
        %v244 = vsub.f32 %v239, %v242
        %v245 = vmul.f32 %v243, %v243
        %v246 = vmul.f32 %v244, %v244
        %v247 = vadd.f32 %v235, %v245
        %v248 = vadd.f32 %v236, %v246
        %s249 = scalar_lea.vmem %s156, 192 [#allocation3]
        %v250 = vld [vmem:[%s249] sm:$0xff]
        %v251 = vld [vmem:[%s249 + $0x8] sm:$0xff]
        %s252 = scalar_lea.vmem %s156, 576 [#allocation3]
        %v253 = vld [vmem:[%s252] sm:$0xff]
        %v254 = vld [vmem:[%s252 + $0x8] sm:$0xff]
        %v255 = vsub.f32 %v250, %v253
        %v256 = vsub.f32 %v251, %v254
        %v257 = vmul.f32 %v255, %v255
        %v258 = vmul.f32 %v256, %v256
        %v259 = vadd.f32 %v247, %v257
        %v260 = vadd.f32 %v248, %v258
        %s261 = scalar_lea.vmem %s156, 208 [#allocation3]
        %v262 = vld [vmem:[%s261] sm:$0xff]
        %v263 = vld [vmem:[%s261 + $0x8] sm:$0xff]
        %s264 = scalar_lea.vmem %s156, 592 [#allocation3]
        %v265 = vld [vmem:[%s264] sm:$0xff]
        %v266 = vld [vmem:[%s264 + $0x8] sm:$0xff]
        %v267 = vsub.f32 %v262, %v265
        %v268 = vsub.f32 %v263, %v266
        %v269 = vmul.f32 %v267, %v267
        %v270 = vmul.f32 %v268, %v268
        %v271 = vadd.f32 %v259, %v269
        %v272 = vadd.f32 %v260, %v270
        %s273 = scalar_lea.vmem %s156, 224 [#allocation3]
        %v274 = vld [vmem:[%s273] sm:$0xff]
        %v275 = vld [vmem:[%s273 + $0x8] sm:$0xff]
        %s276 = scalar_lea.vmem %s156, 608 [#allocation3]
        %v277 = vld [vmem:[%s276] sm:$0xff]
        %v278 = vld [vmem:[%s276 + $0x8] sm:$0xff]
        %v279 = vsub.f32 %v274, %v277
        %v280 = vsub.f32 %v275, %v278
        %v281 = vmul.f32 %v279, %v279
        %v282 = vmul.f32 %v280, %v280
        %v283 = vadd.f32 %v271, %v281
        %v284 = vadd.f32 %v272, %v282
        %s285 = scalar_lea.vmem %s156, 240 [#allocation3]
        %v286 = vld [vmem:[%s285] sm:$0xff]
        %v287 = vld [vmem:[%s285 + $0x8] sm:$0xff]
        %s288 = scalar_lea.vmem %s156, 624 [#allocation3]
        %v289 = vld [vmem:[%s288] sm:$0xff]
        %v290 = vld [vmem:[%s288 + $0x8] sm:$0xff]
        %v291 = vsub.f32 %v286, %v289
        %v292 = vsub.f32 %v287, %v290
        %v293 = vmul.f32 %v291, %v291
        %v294 = vmul.f32 %v292, %v292
        %v295 = vadd.f32 %v283, %v293
        %v296 = vadd.f32 %v284, %v294
        %s297 = scalar_lea.vmem %s156, 256 [#allocation3]
        %v298 = vld [vmem:[%s297] sm:$0xff]
        %v299 = vld [vmem:[%s297 + $0x8] sm:$0xff]
        %s300 = scalar_lea.vmem %s156, 640 [#allocation3]
        %v301 = vld [vmem:[%s300] sm:$0xff]
        %v302 = vld [vmem:[%s300 + $0x8] sm:$0xff]
        %v303 = vsub.f32 %v298, %v301
        %v304 = vsub.f32 %v299, %v302
        %v305 = vmul.f32 %v303, %v303
        %v306 = vmul.f32 %v304, %v304
        %v307 = vadd.f32 %v295, %v305
        %v308 = vadd.f32 %v296, %v306
        %s309 = scalar_lea.vmem %s156, 272 [#allocation3]
        %v310 = vld [vmem:[%s309] sm:$0xff]
        %v311 = vld [vmem:[%s309 + $0x8] sm:$0xff]
        %s312 = scalar_lea.vmem %s156, 656 [#allocation3]
        %v313 = vld [vmem:[%s312] sm:$0xff]
        %v314 = vld [vmem:[%s312 + $0x8] sm:$0xff]
        %v315 = vsub.f32 %v310, %v313
        %v316 = vsub.f32 %v311, %v314
        %v317 = vmul.f32 %v315, %v315
        %v318 = vmul.f32 %v316, %v316
        %v319 = vadd.f32 %v307, %v317
        %v320 = vadd.f32 %v308, %v318
        %s321 = scalar_lea.vmem %s156, 288 [#allocation3]
        %v322 = vld [vmem:[%s321] sm:$0xff]
        %v323 = vld [vmem:[%s321 + $0x8] sm:$0xff]
        %s324 = scalar_lea.vmem %s156, 672 [#allocation3]
        %v325 = vld [vmem:[%s324] sm:$0xff]
        %v326 = vld [vmem:[%s324 + $0x8] sm:$0xff]
        %v327 = vsub.f32 %v322, %v325
        %v328 = vsub.f32 %v323, %v326
        %v329 = vmul.f32 %v327, %v327
        %v330 = vmul.f32 %v328, %v328
        %v331 = vadd.f32 %v319, %v329
        %v332 = vadd.f32 %v320, %v330
        %s333 = scalar_lea.vmem %s156, 304 [#allocation3]
        %v334 = vld [vmem:[%s333] sm:$0xff]
        %v335 = vld [vmem:[%s333 + $0x8] sm:$0xff]
        %s336 = scalar_lea.vmem %s156, 688 [#allocation3]
        %v337 = vld [vmem:[%s336] sm:$0xff]
        %v338 = vld [vmem:[%s336 + $0x8] sm:$0xff]
        %v339 = vsub.f32 %v334, %v337
        %v340 = vsub.f32 %v335, %v338
        %v341 = vmul.f32 %v339, %v339
        %v342 = vmul.f32 %v340, %v340
        %v343 = vadd.f32 %v331, %v341
        %v344 = vadd.f32 %v332, %v342
        %s345 = scalar_lea.vmem %s156, 320 [#allocation3]
        %v346 = vld [vmem:[%s345] sm:$0xff]
        %v347 = vld [vmem:[%s345 + $0x8] sm:$0xff]
        %s348 = scalar_lea.vmem %s156, 704 [#allocation3]
        %v349 = vld [vmem:[%s348] sm:$0xff]
        %v350 = vld [vmem:[%s348 + $0x8] sm:$0xff]
        %v351 = vsub.f32 %v346, %v349
        %v352 = vsub.f32 %v347, %v350
        %v353 = vmul.f32 %v351, %v351
        %v354 = vmul.f32 %v352, %v352
        %v355 = vadd.f32 %v343, %v353
        %v356 = vadd.f32 %v344, %v354
        %s357 = scalar_lea.vmem %s156, 336 [#allocation3]
        %v358 = vld [vmem:[%s357] sm:$0xff]
        %v359 = vld [vmem:[%s357 + $0x8] sm:$0xff]
        %s360 = scalar_lea.vmem %s156, 720 [#allocation3]
        %v361 = vld [vmem:[%s360] sm:$0xff]
        %v362 = vld [vmem:[%s360 + $0x8] sm:$0xff]
        %v363 = vsub.f32 %v358, %v361
        %v364 = vsub.f32 %v359, %v362
        %v365 = vmul.f32 %v363, %v363
        %v366 = vmul.f32 %v364, %v364
        %v367 = vadd.f32 %v355, %v365
        %v368 = vadd.f32 %v356, %v366
        %s369 = scalar_lea.vmem %s156, 352 [#allocation3]
        %v370 = vld [vmem:[%s369] sm:$0xff]
        %v371 = vld [vmem:[%s369 + $0x8] sm:$0xff]
        %s372 = scalar_lea.vmem %s156, 736 [#allocation3]
        %v373 = vld [vmem:[%s372] sm:$0xff]
        %v374 = vld [vmem:[%s372 + $0x8] sm:$0xff]
        %v375 = vsub.f32 %v370, %v373
        %v376 = vsub.f32 %v371, %v374
        %v377 = vmul.f32 %v375, %v375
        %v378 = vmul.f32 %v376, %v376
        %v379 = vadd.f32 %v367, %v377
        %v380 = vadd.f32 %v368, %v378
        %s381 = scalar_lea.vmem %s156, 368 [#allocation3]
        %v382 = vld [vmem:[%s381] sm:$0xff]
        %v383 = vld [vmem:[%s381 + $0x8] sm:$0xff]
        %s384 = scalar_lea.vmem %s156, 752 [#allocation3]
        %v385 = vld [vmem:[%s384] sm:$0xff]
        %v386 = vld [vmem:[%s384 + $0x8] sm:$0xff]
        %v387 = vsub.f32 %v382, %v385
        %v388 = vsub.f32 %v383, %v386
        %v389 = vmul.f32 %v387, %v387
        %v390 = vmul.f32 %v388, %v388
        %v391 = vadd.f32 %v379, %v389
        %v392 = vadd.f32 %v380, %v390
        %s393 = scalar_lea.vmem %s156, 384 [#allocation3]
        %v394 = vld [vmem:[%s393] sm:$0xff]
        %v395 = vld [vmem:[%s393 + $0x8] sm:$0xff]
        %s396 = scalar_lea.vmem %s156, 768 [#allocation3]
        %v397 = vld [vmem:[%s396] sm:$0xff]
        %v398 = vld [vmem:[%s396 + $0x8] sm:$0xff]
        %v399 = vsub.f32 %v394, %v397
        %v400 = vsub.f32 %v395, %v398
        %v401 = vmul.f32 %v399, %v399
        %v402 = vmul.f32 %v400, %v400
        %v403 = vadd.f32 %v391, %v401
        %v404 = vadd.f32 %v392, %v402
        %s405 = scalar_lea.vmem %s156, 400 [#allocation3]
        %v406 = vld [vmem:[%s405] sm:$0xff]
        %v407 = vld [vmem:[%s405 + $0x8] sm:$0xff]
        %s408 = scalar_lea.vmem %s156, 784 [#allocation3]
        %v409 = vld [vmem:[%s408] sm:$0xff]
        %v410 = vld [vmem:[%s408 + $0x8] sm:$0xff]
        %v411 = vsub.f32 %v406, %v409
        %v412 = vsub.f32 %v407, %v410
        %v413 = vmul.f32 %v411, %v411
        %v414 = vmul.f32 %v412, %v412
        %v415 = vadd.f32 %v403, %v413
        %v416 = vadd.f32 %v404, %v414
        %s417 = scalar_lea.vmem %s156, 416 [#allocation3]
        %v418 = vld [vmem:[%s417] sm:$0xff]
        %v419 = vld [vmem:[%s417 + $0x8] sm:$0xff]
        %s420 = scalar_lea.vmem %s156, 800 [#allocation3]
        %v421 = vld [vmem:[%s420] sm:$0xff]
        %v422 = vld [vmem:[%s420 + $0x8] sm:$0xff]
        %v423 = vsub.f32 %v418, %v421
        %v424 = vsub.f32 %v419, %v422
        %v425 = vmul.f32 %v423, %v423
        %v426 = vmul.f32 %v424, %v424
        %v427 = vadd.f32 %v415, %v425
        %v428 = vadd.f32 %v416, %v426
        %s429 = scalar_lea.vmem %s156, 432 [#allocation3]
        %v430 = vld [vmem:[%s429] sm:$0xff]
        %v431 = vld [vmem:[%s429 + $0x8] sm:$0xff]
        %s432 = scalar_lea.vmem %s156, 816 [#allocation3]
        %v433 = vld [vmem:[%s432] sm:$0xff]
        %v434 = vld [vmem:[%s432 + $0x8] sm:$0xff]
        %v435 = vsub.f32 %v430, %v433
        %v436 = vsub.f32 %v431, %v434
        %v437 = vmul.f32 %v435, %v435
        %v438 = vmul.f32 %v436, %v436
        %v439 = vadd.f32 %v427, %v437
        %v440 = vadd.f32 %v428, %v438
        %s441 = scalar_lea.vmem %s156, 448 [#allocation3]
        %v442 = vld [vmem:[%s441] sm:$0xff]
        %v443 = vld [vmem:[%s441 + $0x8] sm:$0xff]
        %s444 = scalar_lea.vmem %s156, 832 [#allocation3]
        %v445 = vld [vmem:[%s444] sm:$0xff]
        %v446 = vld [vmem:[%s444 + $0x8] sm:$0xff]
        %v447 = vsub.f32 %v442, %v445
        %v448 = vsub.f32 %v443, %v446
        %v449 = vmul.f32 %v447, %v447
        %v450 = vmul.f32 %v448, %v448
        %v451 = vadd.f32 %v439, %v449
        %v452 = vadd.f32 %v440, %v450
        %s453 = scalar_lea.vmem %s156, 464 [#allocation3]
        %v454 = vld [vmem:[%s453] sm:$0xff]
        %v455 = vld [vmem:[%s453 + $0x8] sm:$0xff]
        %s456 = scalar_lea.vmem %s156, 848 [#allocation3]
        %v457 = vld [vmem:[%s456] sm:$0xff]
        %v458 = vld [vmem:[%s456 + $0x8] sm:$0xff]
        %v459 = vsub.f32 %v454, %v457
        %v460 = vsub.f32 %v455, %v458
        %v461 = vmul.f32 %v459, %v459
        %v462 = vmul.f32 %v460, %v460
        %v463 = vadd.f32 %v451, %v461
        %v464 = vadd.f32 %v452, %v462
        %s465 = scalar_lea.vmem [#allocation2], 48
        %v466 = vld [vmem:[%s465] sm:$0xff]
        %v467 = vld [vmem:[%s465 + $0x8] sm:$0xff]
        %v468 = vmul.f32 %v198, %v463
        %v469 = vmul.f32 %v199, %v464
        %v470 = vadd.f32 %v466, %v468
        %v471 = vadd.f32 %v467, %v469
        %472 = vst [vmem:[%s465] sm:$0xff] %v470
        %473 = vst [vmem:[%s465 + $0x8] sm:$0xff] %v471
        %s474 = scalar_lea.vmem %s156, 480 [#allocation3]
        %v475 = vld [vmem:[%s474] sm:$0xff]
        %v476 = vld [vmem:[%s474 + $0x8] sm:$0xff]
        %s477 = scalar_lea.vmem %s156, 496 [#allocation3]
        %v478 = vld [vmem:[%s477] sm:$0xff]
        %v479 = vld [vmem:[%s477 + $0x8] sm:$0xff]
        %s480 = scalar_lea.vmem %s156, 512 [#allocation3]
        %v481 = vld [vmem:[%s480] sm:$0xff]
        %v482 = vld [vmem:[%s480 + $0x8] sm:$0xff]
        %s483 = scalar_lea.vmem %s156, 528 [#allocation3]
        %v484 = vld [vmem:[%s483] sm:$0xff]
        %v485 = vld [vmem:[%s483 + $0x8] sm:$0xff]
        %v486 = vmul.f32 %v475, 0.25
        %v487 = vmul.f32 %v476, 0.25
        %v488 = vmul.f32 %v478, 0.25
        %v489 = vmul.f32 %v479, 0.25
        %v490 = vmul.f32 %v481, 0.5
        %v491 = vmul.f32 %v482, 0.5
        %v492 = vsub.f32 %v486, %v490
        %v493 = vsub.f32 %v487, %v491
        %v494 = vmul.f32 %v484, 0.5
        %v495 = vmul.f32 %v485, 0.5
        %v496 = vsub.f32 %v488, %v494
        %v497 = vsub.f32 %v489, %v495
        %v498 = vadd.f32 %v486, %v490
        %v499 = vadd.f32 %v487, %v491
        %v500 = vadd.f32 %v488, %v494
        %v501 = vadd.f32 %v489, %v495
        %v502 = vsub.f32 %v498, %v492
        %v503 = vsub.f32 %v499, %v493
        %v504 = vsub.f32 %v500, %v496
        %v505 = vsub.f32 %v501, %v497
        %v506 = vmul.f32 %v502, %v504
        %v507 = vmul.f32 %v503, %v505
        %v508 = vld [vmem:[%s156] sm:$0xff]
        %v509 = vld [vmem:[%s156 + $0x8] sm:$0xff]
        %s510 = scalar_lea.vmem %s156, 16 [#allocation3]
        %v511 = vld [vmem:[%s510] sm:$0xff]
        %v512 = vld [vmem:[%s510 + $0x8] sm:$0xff]
        %s513 = scalar_lea.vmem %s156, 32 [#allocation3]
        %v514 = vld [vmem:[%s513] sm:$0xff]
        %v515 = vld [vmem:[%s513 + $0x8] sm:$0xff]
        %s516 = scalar_lea.vmem %s156, 48 [#allocation3]
        %v517 = vld [vmem:[%s516] sm:$0xff]
        %v518 = vld [vmem:[%s516 + $0x8] sm:$0xff]
        %s519 = scalar_lea.vmem %s156, 80 [#allocation3]
        %v520 = vld [vmem:[%s519] sm:$0xff]
        %v521 = vld [vmem:[%s519 + $0x8] sm:$0xff]
        %s522 = scalar_lea.vmem %s156, 96 [#allocation3]
        %v523 = vld [vmem:[%s522] sm:$0xff]
        %v524 = vld [vmem:[%s522 + $0x8] sm:$0xff]
        %s525 = scalar_lea.vmem %s156, 112 [#allocation3]
        %v526 = vld [vmem:[%s525] sm:$0xff]
        %v527 = vld [vmem:[%s525 + $0x8] sm:$0xff]
        %s528 = scalar_lea.vmem %s156, 128 [#allocation3]
        %v529 = vld [vmem:[%s528] sm:$0xff]
        %v530 = vld [vmem:[%s528 + $0x8] sm:$0xff]
        %v531 = vmul.f32 %v508, 0.25
        %v532 = vmul.f32 %v509, 0.25
        %v533 = vmul.f32 %v511, 0.25
        %v534 = vmul.f32 %v512, 0.25
        %v535 = vmul.f32 %v514, 0.5
        %v536 = vmul.f32 %v515, 0.5
        %v537 = vsub.f32 %v531, %v535
        %v538 = vsub.f32 %v532, %v536
        %v539 = vmul.f32 %v517, 0.5
        %v540 = vmul.f32 %v518, 0.5
        %v541 = vsub.f32 %v533, %v539
        %v542 = vsub.f32 %v534, %v540
        %v543 = vadd.f32 %v531, %v535
        %v544 = vadd.f32 %v532, %v536
        %v545 = vadd.f32 %v533, %v539
        %v546 = vadd.f32 %v534, %v540
        %v547 = vmin.f32 %v498, %v543
        %v548 = vmin.f32 %v499, %v544
        %v549 = vmax.f32 %v492, %v537
        %v550 = vmax.f32 %v493, %v538
        %v551 = vsub.f32 %v547, %v549
        %v552 = vsub.f32 %v548, %v550
        %v553 = vmax.f32 %v551, 0.0
        %v554 = vmax.f32 %v552, 0.0
        %v555 = vmin.f32 %v500, %v545
        %v556 = vmin.f32 %v501, %v546
        %v557 = vmax.f32 %v496, %v541
        %v558 = vmax.f32 %v497, %v542
        %v559 = vsub.f32 %v555, %v557
        %v560 = vsub.f32 %v556, %v558
        %v561 = vmax.f32 %v559, 0.0
        %v562 = vmax.f32 %v560, 0.0
        %v563 = vmul.f32 %v553, %v561
        %v564 = vmul.f32 %v554, %v562
        %v565 = vsub.f32 %v543, %v537
        %v566 = vsub.f32 %v544, %v538
        %v567 = vsub.f32 %v545, %v541
        %v568 = vsub.f32 %v546, %v542
        %v569 = vmul.f32 %v565, %v567
        %v570 = vmul.f32 %v566, %v568
        %v571 = vadd.f32 %v506, %v569
        %v572 = vadd.f32 %v507, %v570
        %v573 = vsub.f32 %v571, %v563
        %v574 = vsub.f32 %v572, %v564
        %v575 = vsel %vm200, %v573, 1.0
        %v576 = vsel %vm201, %v574, 1.0
        %v577 = vrcp.pop %v575
        %v578 = vrcp.pop %v576
        %v579 = vmul.f32 %v575, %v577
        %v580 = vmul.f32 %v576, %v578
        %v581 = vsub.f32 2.0, %v579
        %v582 = vsub.f32 2.0, %v580
        %v583 = vmul.f32 %v577, %v581
        %v584 = vmul.f32 %v578, %v582
        %v585 = vmul.f32 %v563, %v583
        %v586 = vmul.f32 %v564, %v584
        %v587 = vmul.f32 %v520, 0.25
        %v588 = vmul.f32 %v521, 0.25
        %v589 = vmul.f32 %v523, 0.25
        %v590 = vmul.f32 %v524, 0.25
        %v591 = vmul.f32 %v526, 0.5
        %v592 = vmul.f32 %v527, 0.5
        %v593 = vsub.f32 %v587, %v591
        %v594 = vsub.f32 %v588, %v592
        %v595 = vmul.f32 %v529, 0.5
        %v596 = vmul.f32 %v530, 0.5
        %v597 = vsub.f32 %v589, %v595
        %v598 = vsub.f32 %v590, %v596
        %v599 = vadd.f32 %v587, %v591
        %v600 = vadd.f32 %v588, %v592
        %v601 = vadd.f32 %v589, %v595
        %v602 = vadd.f32 %v590, %v596
        %v603 = vmin.f32 %v498, %v599
        %v604 = vmin.f32 %v499, %v600
        %v605 = vmax.f32 %v492, %v593
        %v606 = vmax.f32 %v493, %v594
        %v607 = vsub.f32 %v603, %v605
        %v608 = vsub.f32 %v604, %v606
        %v609 = vmax.f32 %v607, 0.0
        %v610 = vmax.f32 %v608, 0.0
        %v611 = vmin.f32 %v500, %v601
        %v612 = vmin.f32 %v501, %v602
        %v613 = vmax.f32 %v496, %v597
        %v614 = vmax.f32 %v497, %v598
        %v615 = vsub.f32 %v611, %v613
        %v616 = vsub.f32 %v612, %v614
        %v617 = vmax.f32 %v615, 0.0
        %v618 = vmax.f32 %v616, 0.0
        %v619 = vmul.f32 %v609, %v617
        %v620 = vmul.f32 %v610, %v618
        %v621 = vsub.f32 %v599, %v593
        %v622 = vsub.f32 %v600, %v594
        %v623 = vsub.f32 %v601, %v597
        %v624 = vsub.f32 %v602, %v598
        %v625 = vmul.f32 %v621, %v623
        %v626 = vmul.f32 %v622, %v624
        %v627 = vadd.f32 %v506, %v625
        %v628 = vadd.f32 %v507, %v626
        %v629 = vsub.f32 %v627, %v619
        %v630 = vsub.f32 %v628, %v620
        %v631 = vsel %vm200, %v629, 1.0
        %v632 = vsel %vm201, %v630, 1.0
        %v633 = vrcp.pop %v631
        %v634 = vrcp.pop %v632
        %v635 = vmul.f32 %v631, %v633
        %v636 = vmul.f32 %v632, %v634
        %v637 = vsub.f32 2.0, %v635
        %v638 = vsub.f32 2.0, %v636
        %v639 = vmul.f32 %v633, %v637
        %v640 = vmul.f32 %v634, %v638
        %v641 = vmul.f32 %v619, %v639
        %v642 = vmul.f32 %v620, %v640
        %vm643 = vcmp.gt.f32.partialorder %v585, %v641
        %vm644 = vcmp.gt.f32.partialorder %v586, %v642
        %v645 = vsel %vm643, %v585, %v641
        %v646 = vsel %vm644, %v586, %v642
        %v647 = vsel %vm643, %v508, %v520
        %v648 = vsel %vm644, %v509, %v521
        %v649 = vsel %vm643, %v511, %v523
        %v650 = vsel %vm644, %v512, %v524
        %v651 = vsel %vm643, %v514, %v526
        %v652 = vsel %vm644, %v515, %v527
        %v653 = vsel %vm643, %v517, %v529
        %v654 = vsel %vm644, %v518, %v530
        %v655 = vsel %vm643, %v203, %v206
        %v656 = vsel %vm644, %v204, %v207
        %v657 = vsub.f32 %v647, %v475
        %v658 = vsub.f32 %v648, %v476
        %v659 = vsub.f32 %v649, %v478
        %v660 = vsub.f32 %v650, %v479
        %v661 = vsel %vm200, %v651, 1.0
        %v662 = vsel %vm201, %v652, 1.0
        %v663 = vrsqrt.pop %v661
        %v664 = vmul.f32 %v661, %v663
        %vm665 = vcmp.eq.f32.partialorder %v661, inf
        %v666 = vsel %vm665, %v661, %v664
        %vm667 = vcmp.eq.f32.partialorder %v661, 0.0
        %v668 = vand.u32 %v661, 2147483648
        %v669 = vsel %vm667, %v668, %v666
        %v670 = vrsqrt.pop %v662
        %v671 = vmul.f32 %v662, %v670
        %vm672 = vcmp.eq.f32.partialorder %v662, inf
        %v673 = vsel %vm672, %v662, %v671
        %vm674 = vcmp.eq.f32.partialorder %v662, 0.0
        %v675 = vand.u32 %v662, 2147483648
        %v676 = vsel %vm674, %v675, %v673
        %v677 = vsel %vm200, %v481, 1.0
        %v678 = vsel %vm201, %v482, 1.0
        %v679 = vrsqrt.pop %v677
        %v680 = vmul.f32 %v677, %v679
        %vm681 = vcmp.eq.f32.partialorder %v677, inf
        %v682 = vsel %vm681, %v677, %v680
        %vm683 = vcmp.eq.f32.partialorder %v677, 0.0
        %v684 = vand.u32 %v677, 2147483648
        %v685 = vsel %vm683, %v684, %v682
        %v686 = vrsqrt.pop %v678
        %v687 = vmul.f32 %v678, %v686
        %vm688 = vcmp.eq.f32.partialorder %v678, inf
        %v689 = vsel %vm688, %v678, %v687
        %vm690 = vcmp.eq.f32.partialorder %v678, 0.0
        %v691 = vand.u32 %v678, 2147483648
        %v692 = vsel %vm690, %v691, %v689
        %v693 = vsub.f32 %v669, %v685
        %v694 = vsub.f32 %v676, %v692
        %v695 = vsel %vm200, %v653, 1.0
        %v696 = vsel %vm201, %v654, 1.0
        %v697 = vrsqrt.pop %v695
        %v698 = vmul.f32 %v695, %v697
        %vm699 = vcmp.eq.f32.partialorder %v695, inf
        %v700 = vsel %vm699, %v695, %v698
        %vm701 = vcmp.eq.f32.partialorder %v695, 0.0
        %v702 = vand.u32 %v695, 2147483648
        %v703 = vsel %vm701, %v702, %v700
        %v704 = vrsqrt.pop %v696
        %v705 = vmul.f32 %v696, %v704
        %vm706 = vcmp.eq.f32.partialorder %v696, inf
        %v707 = vsel %vm706, %v696, %v705
        %vm708 = vcmp.eq.f32.partialorder %v696, 0.0
        %v709 = vand.u32 %v696, 2147483648
        %v710 = vsel %vm708, %v709, %v707
        %v711 = vsel %vm200, %v484, 1.0
        %v712 = vsel %vm201, %v485, 1.0
        %v713 = vrsqrt.pop %v711
        %v714 = vmul.f32 %v711, %v713
        %vm715 = vcmp.eq.f32.partialorder %v711, inf
        %v716 = vsel %vm715, %v711, %v714
        %vm717 = vcmp.eq.f32.partialorder %v711, 0.0
        %v718 = vand.u32 %v711, 2147483648
        %v719 = vsel %vm717, %v718, %v716
        %v720 = vrsqrt.pop %v712
        %v721 = vmul.f32 %v712, %v720
        %vm722 = vcmp.eq.f32.partialorder %v712, inf
        %v723 = vsel %vm722, %v712, %v721
        %vm724 = vcmp.eq.f32.partialorder %v712, 0.0
        %v725 = vand.u32 %v712, 2147483648
        %v726 = vsel %vm724, %v725, %v723
        %v727 = vsub.f32 %v703, %v719
        %v728 = vsub.f32 %v710, %v726
        %v729 = vld [vmem:[#allocation2] sm:$0xff]
        %v730 = vld [vmem:[#allocation2 + $0x8] sm:$0xff]
        %v731 = vmul.f32 %v657, %v657
        %v732 = vmul.f32 %v658, %v658
        %v733 = vmul.f32 %v659, %v659
        %v734 = vmul.f32 %v660, %v660
        %v735 = vadd.f32 %v731, %v733
        %v736 = vadd.f32 %v732, %v734
        %v737 = vmul.f32 %v693, %v693
        %v738 = vmul.f32 %v694, %v694
        %v739 = vadd.f32 %v735, %v737
        %v740 = vadd.f32 %v736, %v738
        %v741 = vmul.f32 %v727, %v727
        %v742 = vmul.f32 %v728, %v728
        %v743 = vadd.f32 %v739, %v741
        %v744 = vadd.f32 %v740, %v742
        %v745 = vmul.f32 %v198, %v743
        %v746 = vmul.f32 %v199, %v744
        %v747 = vadd.f32 %v729, %v745
        %v748 = vadd.f32 %v730, %v746
        %749 = vst [vmem:[#allocation2] sm:$0xff] %v747
        %750 = vst [vmem:[#allocation2 + $0x8] sm:$0xff] %v748
        %v751 = vsub.f32 %v655, %v645
        %v752 = vsub.f32 %v656, %v646
        %s753 = scalar_lea.vmem [#allocation2], 16
        %v754 = vld [vmem:[%s753] sm:$0xff]
        %v755 = vld [vmem:[%s753 + $0x8] sm:$0xff]
        %v756 = vmul.f32 %v751, %v751
        %v757 = vmul.f32 %v752, %v752
        %v758 = vmul.f32 %v198, %v756
        %v759 = vmul.f32 %v199, %v757
        %v760 = vadd.f32 %v754, %v758
        %v761 = vadd.f32 %v755, %v759
        %762 = vst [vmem:[%s753] sm:$0xff] %v760
        %763 = vst [vmem:[%s753 + $0x8] sm:$0xff] %v761
        // Predicated region
        $region33: #{tpu_custom_call.1} parent=23 // pred_check
          %p764 = pneg %p177
        $region34: #{tpu_custom_call.1} parent=23 // pred_check_branch
          %766 = sbr.rel (%p764) target = $region36
        $region35: #{tpu_custom_call.1} parent=23 // pred_region
          %v767 = vld [vmem:[#allocation2] sm:$0xff]
          %v768 = vld [vmem:[#allocation2 + $0x8] sm:$0xff]
          %v769 = vld [vmem:[#allocation2 + $0x10] sm:$0xff]
          %v770 = vld [vmem:[#allocation2 + $0x18] sm:$0xff]
          %v771 = vld [vmem:[#allocation2 + $0x20] sm:$0xff]
          %v772 = vld [vmem:[#allocation2 + $0x28] sm:$0xff]
          %v773 = vld [vmem:[#allocation2 + $0x30] sm:$0xff]
          %v774 = vld [vmem:[#allocation2 + $0x38] sm:$0xff]
          %v775 = vld [vmem:[#allocation2 + $0x40] sm:$0xff]
          %v776 = vld [vmem:[#allocation2 + $0x48] sm:$0xff]
          %v777 = vld [vmem:[#allocation2 + $0x50] sm:$0xff]
          %v778 = vld [vmem:[#allocation2 + $0x58] sm:$0xff]
          %v779 = vld [vmem:[#allocation2 + $0x60] sm:$0xff]
          %v780 = vld [vmem:[#allocation2 + $0x68] sm:$0xff]
          %v781 = vld [vmem:[#allocation2 + $0x70] sm:$0xff]
          %v782 = vld [vmem:[#allocation2 + $0x78] sm:$0xff]
          %v783 = vadd.f32 %v767, %v768
          %v784 = vrot.slane %v783, 4
          %v785 = vadd.f32 %v783, %v784
          %v786 = vrot.slane %v785, 2
          %v787 = vadd.f32 %v785, %v786
          %v788 = vrot.slane %v787, 1
          %v789 = vadd.f32 %v787, %v788
          %v790 = vadd.f32 %v769, %v770
          %v791 = vrot.slane %v790, 4
          %v792 = vadd.f32 %v790, %v791
          %v793 = vrot.slane %v792, 2
          %v794 = vadd.f32 %v792, %v793
          %v795 = vrot.slane %v794, 1
          %v796 = vadd.f32 %v794, %v795
          %v797 = vadd.f32 %v771, %v772
          %v798 = vrot.slane %v797, 4
          %v799 = vadd.f32 %v797, %v798
          %v800 = vrot.slane %v799, 2
          %v801 = vadd.f32 %v799, %v800
          %v802 = vrot.slane %v801, 1
          %v803 = vadd.f32 %v801, %v802
          %v804 = vadd.f32 %v773, %v774
          %v805 = vrot.slane %v804, 4
          %v806 = vadd.f32 %v804, %v805
          %v807 = vrot.slane %v806, 2
          %v808 = vadd.f32 %v806, %v807
          %v809 = vrot.slane %v808, 1
          %v810 = vadd.f32 %v808, %v809
          %v811 = vadd.f32 %v775, %v776
          %v812 = vrot.slane %v811, 4
          %v813 = vadd.f32 %v811, %v812
          %v814 = vrot.slane %v813, 2
          %v815 = vadd.f32 %v813, %v814
          %v816 = vrot.slane %v815, 1
          %v817 = vadd.f32 %v815, %v816
          %v818 = vadd.f32 %v777, %v778
          %v819 = vrot.slane %v818, 4
          %v820 = vadd.f32 %v818, %v819
          %v821 = vrot.slane %v820, 2
          %v822 = vadd.f32 %v820, %v821
          %v823 = vrot.slane %v822, 1
          %v824 = vadd.f32 %v822, %v823
          %v825 = vadd.f32 %v779, %v780
          %v826 = vrot.slane %v825, 4
          %v827 = vadd.f32 %v825, %v826
          %v828 = vrot.slane %v827, 2
          %v829 = vadd.f32 %v827, %v828
          %v830 = vrot.slane %v829, 1
          %v831 = vadd.f32 %v829, %v830
          %v832 = vadd.f32 %v781, %v782
          %v833 = vrot.slane %v832, 4
          %v834 = vadd.f32 %v832, %v833
          %v835 = vrot.slane %v834, 2
          %v836 = vadd.f32 %v834, %v835
          %v837 = vrot.slane %v836, 1
          %v838 = vadd.f32 %v836, %v837
          %vm847 = vcmask 1041409
          %v848 = vsel %vm847, %v796, %v789
          %vm849 = vcmask 1042434
          %v850 = vsel %vm849, %v803, %v848
          %vm851 = vcmask 1043459
          %v852 = vsel %vm851, %v810, %v850
          %vm853 = vcmask 1044484
          %v854 = vsel %vm853, %v817, %v852
          %vm855 = vcmask 1045509
          %v856 = vsel %vm855, %v824, %v854
          %vm857 = vcmask 1046534
          %v858 = vsel %vm857, %v831, %v856
          %vm859 = vcmask 1047559
          %v860 = vsel %vm859, %v838, %v858
          %862 = vst [vmem:[%s174] sm:$0xff] %v860
        $region36: #{tpu_custom_call.1} parent=23 // pred_fallthru
          _
        %s863 = sand.u32 %s66, 1
        %s864 = scalar_lea.sflag [#allocation5], %s863
        %s865 = sand.u32 %s66, 1
        %s866 = smul.addr %s865, 8
        %s867 = scalar_lea.vmem [#allocation6], %s866
        // Predicated region
        $region37: #{tpu_custom_call.1} parent=23 // pred_check
          %p868 = pneg %p76
        $region38: #{tpu_custom_call.1} parent=23 // pred_check_branch
          %870 = sbr.rel (%p868) target = $region40
        $region39: #{tpu_custom_call.1} parent=23 // pred_region
          %s872 = ssub.s32 128, 128
          %873 = vsyncadd %s864, %s872
          %s874 = smul.addr %s22, 128
          %s875 = scalar_lea.hbm %s1, %s874
          %s877 = sshll.u32 %s867, 4
          %s878 = int_to_ptr.vmem [resolvable:$true] %s877
          %880 = dma.vmem_to_hbm [thread:$0]  %s878, 128, %s875, %s864
        $region40: #{tpu_custom_call.1} parent=23 // pred_fallthru
          _
      $region24: #{tpu_custom_call.1} parent=5 // pred_fallthru
        _
      %p881 = scmp.le.s32.totalorder 2, %s13
      // Predicated region
      $region41: #{tpu_custom_call.1} parent=5 // pred_check
        %p882 = pneg %p881
      $region42: #{tpu_custom_call.1} parent=5 // pred_check_branch
        %884 = sbr.rel (%p882) target = $region44
      $region43: #{tpu_custom_call.1} parent=5 // pred_region
        %s885 = ssub.s32 %s13, 2
        // Predicated region
        $region45: #{tpu_custom_call.1} parent=43 // pred_check
          %p886 = pneg %p82
        $region46: #{tpu_custom_call.1} parent=43 // pred_check_branch
          %888 = sbr.rel (%p886) target = $region48
        $region47: #{tpu_custom_call.1} parent=43 // pred_region
          %s889 = sand.u32 %s67, 1
          %s890 = scalar_lea.sflag [#allocation5], %s889
          %s891 = sand.u32 %s67, 1
          %s892 = smul.addr %s891, 8
          %s893 = scalar_lea.vmem [#allocation6], %s892
          %894 = dma.done %s890, 128
        $region48: #{tpu_custom_call.1} parent=43 // pred_fallthru
          _
      $region44: #{tpu_custom_call.1} parent=5 // pred_fallthru
        _
    $region6: #{tpu_custom_call.1} parent=1 // loop_footer
      %s17 = sadd.s32 1, %s13
    $region7: #{tpu_custom_call.1} parent=1 // loop_footer_branch
      %12 = sbr.rel target = $region3
    $region8: #{tpu_custom_call.1} parent=1 // loop_exit
      _
    %895 = vsyncpa [#allocation4], 1
    %s896 = scalar_lea.sflag [#allocation4], 1
    %897 = vsyncpa %s896, 1
    %898 = vsyncpa [#allocation5], 1
    %s899 = scalar_lea.sflag [#allocation5], 1
    %900 = vsyncpa %s899, 1

</llo_original>
